<compile_context>
chip_gen: v7x
topology: tpu7x:2x2x1
jax: 0.10.0
libtpu: 0.0.40
codegen_flags: <defaults>
</compile_context>

<pallas_src>
import jax
import jax.numpy as jnp
from jax import lax
from jax.experimental import pallas as pl
from jax.experimental.pallas import tpu as pltpu

INPUT_DIM = 500
HIDDEN_DIM = 50
OUTPUT_DIM = 5
NUM_LAYERS = 2

IN_PAD = 512   # INPUT_DIM padded to a multiple of 128 lanes
H_PAD = 128    # HIDDEN_DIM padded to one full 128-lane vreg
SUB = 8        # sublane tile


def _round_up(n, m):
    return (n + m - 1) // m * m


def make_rnn_kernel(T):
    """Single-invocation kernel: whole sequence resident in VMEM.

    x_ref:       (T_pad, IN_PAD)   time-major input for the selected batch row
    w_*_ref:     zero-padded, pre-transposed weights, layout (in, out)
    b0/b1_ref:   (1, H_PAD) fused (b_ih + b_hh) biases
    out_ref:     (NUM_LAYERS, SUB, H_PAD) final hidden state per layer (row 0 real)
    xw0_scr:     (T_pad, H_PAD) scratch for the batched layer-0 input projection
    """

    def kernel(x_ref, w_ih0_ref, w_hh0_ref, b0_ref,
               w_ih1_ref, w_hh1_ref, b1_ref,
               out_ref, xw0_scr):
        # Non-recurrent layer-0 input projection for ALL timesteps in one MXU
        # pass; it is the only matmul touching the 512-wide contraction and has
        # no time dependence, so it stays off the serial critical path.
        xw0_scr[...] = (
            jnp.dot(x_ref[...], w_ih0_ref[...],
                    preferred_element_type=jnp.float32)
            + b0_ref[...])

        # Hoist loop-invariant weight/bias loads out of the recurrence.
        w_hh0 = w_hh0_ref[...]
        w_ih1 = w_ih1_ref[...]
        w_hh1 = w_hh1_ref[...]
        b1 = b1_ref[...]

        h_init = jnp.zeros((SUB, H_PAD), jnp.float32)

        def step(t, carry):
            h0, h1 = carry
            xw0_t = xw0_scr[pl.ds(t, 1), :]                         # (1, H_PAD)
            # Padded cols (>= HIDDEN_DIM) stay exactly zero: padded weight
            # rows/cols and biases are zero and relu(0) = 0.
            h0 = jnp.maximum(
                xw0_t
                + jnp.dot(h0, w_hh0, preferred_element_type=jnp.float32),
                0.0)
            h1 = jnp.maximum(
                jnp.dot(h0, w_ih1, preferred_element_type=jnp.float32)
                + jnp.dot(h1, w_hh1, preferred_element_type=jnp.float32)
                + b1,
                0.0)
            return h0, h1

        h0, h1 = lax.fori_loop(0, T, step, (h_init, h_init),
                               unroll=(T <= 32))

        # Full-tile, lane-dense stores (no masked vst, no concatenate).
        out_ref[0] = h0
        out_ref[1] = h1

    return kernel


def rnn_forward(x, params):
    """x: (B, T, INPUT_DIM) float32, batch-first like the PyTorch module."""
    B, T, D = x.shape
    assert D == INPUT_DIM

    (w_ih0, w_hh0, b_ih0, b_hh0,
     w_ih1, w_hh1, b_ih1, b_hh1,
     w_fc, b_fc) = params

    # PyTorch quirk reproduced exactly: hn has shape (num_layers, B, H) and the
    # module does hn[:, -1, :] -> only batch element B-1 ever reaches the
    # FC / log-softmax, so run the recurrence for that single row only.
    x_sel = x[B - 1]                                       # (T, INPUT_DIM)

    T_pad = _round_up(T, SUB)
    x_pad = jnp.zeros((T_pad, IN_PAD), jnp.float32).at[:T, :INPUT_DIM].set(x_sel)

    # Pre-transpose to (in, out) and zero-pad to (8,128)-aligned tiles so every
    # kernel load/store is unmasked and contractions match the 128-lane vreg.
    def pad2(w, r, c):
        return jnp.zeros((r, c), jnp.float32).at[:w.shape[0], :w.shape[1]].set(w)

    w_ih0_p = pad2(w_ih0.T, IN_PAD, H_PAD)
    w_hh0_p = pad2(w_hh0.T, H_PAD, H_PAD)
    w_ih1_p = pad2(w_ih1.T, H_PAD, H_PAD)
    w_hh1_p = pad2(w_hh1.T, H_PAD, H_PAD)
    b0_p = jnp.zeros((1, H_PAD), jnp.float32).at[0, :HIDDEN_DIM].set(b_ih0 + b_hh0)
    b1_p = jnp.zeros((1, H_PAD), jnp.float32).at[0, :HIDDEN_DIM].set(b_ih1 + b_hh1)

    grid_spec = pltpu.PrefetchScalarGridSpec(
        num_scalar_prefetch=0,
        grid=(1,),                     # single invocation; recurrence lives inside
        in_specs=[
            pl.BlockSpec((T_pad, IN_PAD), lambda i: (0, 0)),
            pl.BlockSpec((IN_PAD, H_PAD), lambda i: (0, 0)),
            pl.BlockSpec((H_PAD, H_PAD), lambda i: (0, 0)),
            pl.BlockSpec((1, H_PAD), lambda i: (0, 0)),
            pl.BlockSpec((H_PAD, H_PAD), lambda i: (0, 0)),
            pl.BlockSpec((H_PAD, H_PAD), lambda i: (0, 0)),
            pl.BlockSpec((1, H_PAD), lambda i: (0, 0)),
        ],
        out_specs=pl.BlockSpec((NUM_LAYERS, SUB, H_PAD), lambda i: (0, 0, 0)),
        scratch_shapes=[pltpu.VMEM((T_pad, H_PAD), jnp.float32)],
    )

    hn_pad = pl.pallas_call(
        make_rnn_kernel(T),
        out_shape=jax.ShapeDtypeStruct((NUM_LAYERS, SUB, H_PAD), jnp.float32),
        grid_spec=grid_spec,
        compiler_params=pltpu.CompilerParams(
            dimension_semantics=("arbitrary",)),
    )(x_pad, w_ih0_p, w_hh0_p, b0_p, w_ih1_p, w_hh1_p, b1_p)

    hn_sel = hn_pad[:, 0, :HIDDEN_DIM]                     # (NUM_LAYERS, HIDDEN_DIM)
    # Tiny (2,50)x(50,5) FC + log-softmax epilogue in plain JAX: keeps the
    # kernel output lane-dense and avoids a masked 5-wide store in the kernel.
    z = hn_sel @ w_fc.T + b_fc                             # (NUM_LAYERS, OUTPUT_DIM)
    return jax.nn.log_softmax(z, axis=1)


def rnn_reference(x, params):
    """Pure-JAX reference matching torch.nn.RNN(relu, 2 layers, batch_first)."""
    (w_ih0, w_hh0, b_ih0, b_hh0,
     w_ih1, w_hh1, b_ih1, b_hh1,
     w_fc, b_fc) = params
    B, T, _ = x.shape
    h0 = jnp.zeros((B, HIDDEN_DIM), jnp.float32)
    h1 = jnp.zeros((B, HIDDEN_DIM), jnp.float32)
    for t in range(T):
        xt = x[:, t, :]
        h0 = jax.nn.relu(xt @ w_ih0.T + b_ih0 + h0 @ w_hh0.T + b_hh0)
        h1 = jax.nn.relu(h0 @ w_ih1.T + b_ih1 + h1 @ w_hh1.T + b_hh1)
    hn = jnp.stack([h0, h1], axis=0)       # (num_layers, B, H)
    hn_sel = hn[:, -1, :]                  # (num_layers, H)  -- PyTorch quirk
    z = hn_sel @ w_fc.T + b_fc
    return jax.nn.log_softmax(z, axis=1)


def init_params(key):
    k = 1.0 / jnp.sqrt(HIDDEN_DIM)
    keys = jax.random.split(key, 10)
    u = lambda kk, shape: jax.random.uniform(kk, shape, jnp.float32, -k, k)
    w_ih0 = u(keys[0], (HIDDEN_DIM, INPUT_DIM))
    w_hh0 = u(keys[1], (HIDDEN_DIM, HIDDEN_DIM))
    b_ih0 = u(keys[2], (HIDDEN_DIM,))
    b_hh0 = u(keys[3], (HIDDEN_DIM,))
    w_ih1 = u(keys[4], (HIDDEN_DIM, HIDDEN_DIM))
    w_hh1 = u(keys[5], (HIDDEN_DIM, HIDDEN_DIM))
    b_ih1 = u(keys[6], (HIDDEN_DIM,))
    b_hh1 = u(keys[7], (HIDDEN_DIM,))
    w_fc = u(keys[8], (OUTPUT_DIM, HIDDEN_DIM))
    b_fc = u(keys[9], (OUTPUT_DIM,))
    return (w_ih0, w_hh0, b_ih0, b_hh0,
            w_ih1, w_hh1, b_ih1, b_hh1,
            w_fc, b_fc)


if __name__ == "__main__":
    key = jax.random.PRNGKey(0)
    pkey, xkey = jax.random.split(key)
    params = init_params(pkey)

    B, T = 3, 8
    x = jax.random.normal(xkey, (B, T, INPUT_DIM), jnp.float32)

    out = jax.jit(rnn_forward)(x, params)
    out = jax.block_until_ready(out)

    ref = rnn_reference(x, params)
    assert out.shape == (NUM_LAYERS, OUTPUT_DIM)
    assert jnp.allclose(out, ref, rtol=1e-4, atol=1e-4), (out, ref)

    print("KERNEL_OK")
</pallas_src>

<mosaic_0001>
module attributes {stable_mosaic.version = 11 : i64} {
  func.func @kernel(%arg0: i32, %arg1: memref<8x512xf32, #tpu.memory_space<vmem>>, %arg2: memref<512x128xf32, #tpu.memory_space<vmem>>, %arg3: memref<128x128xf32, #tpu.memory_space<vmem>>, %arg4: memref<1x128xf32, #tpu.memory_space<vmem>>, %arg5: memref<128x128xf32, #tpu.memory_space<vmem>>, %arg6: memref<128x128xf32, #tpu.memory_space<vmem>>, %arg7: memref<1x128xf32, #tpu.memory_space<vmem>>, %arg8: memref<2x8x128xf32, #tpu.memory_space<vmem>>, %arg9: memref<8x128xf32, #tpu.memory_space<vmem>>) attributes {dimension_semantics = [#tpu.dimension_semantics<arbitrary>], iteration_bounds = array<i64: 1>, scalar_prefetch = 0 : i64, scratch_operands = 1 : i64, tpu.core_type = #tpu.core_type<tc>, window_params = [{pipeline_mode = #tpu.pipeline_mode<synchronous>, transform_indices = @transform_0, window_bounds = array<i64: 8, 512>}, {pipeline_mode = #tpu.pipeline_mode<synchronous>, transform_indices = @transform_1, window_bounds = array<i64: 512, 128>}, {pipeline_mode = #tpu.pipeline_mode<synchronous>, transform_indices = @transform_2, window_bounds = array<i64: 128, 128>}, {pipeline_mode = #tpu.pipeline_mode<synchronous>, transform_indices = @transform_3, window_bounds = array<i64: 1, 128>}, {pipeline_mode = #tpu.pipeline_mode<synchronous>, transform_indices = @transform_4, window_bounds = array<i64: 128, 128>}, {pipeline_mode = #tpu.pipeline_mode<synchronous>, transform_indices = @transform_5, window_bounds = array<i64: 128, 128>}, {pipeline_mode = #tpu.pipeline_mode<synchronous>, transform_indices = @transform_6, window_bounds = array<i64: 1, 128>}, {pipeline_mode = #tpu.pipeline_mode<synchronous>, transform_indices = @transform_7, window_bounds = array<i64: 2, 8, 128>}]} {
    %c0 = arith.constant 0 : index
    %c0_0 = arith.constant 0 : index
    %0 = vector.load %arg1[%c0, %c0_0] : memref<8x512xf32, #tpu.memory_space<vmem>>, vector<8x512xf32>
    %c0_1 = arith.constant 0 : index
    %c0_2 = arith.constant 0 : index
    %1 = vector.load %arg2[%c0_1, %c0_2] : memref<512x128xf32, #tpu.memory_space<vmem>>, vector<512x128xf32>
    %cst = arith.constant dense<0.000000e+00> : vector<8x128xf32>
    %2 = tpu.matmul %0, %1, %cst {dimension_numbers = #tpu.dot_dimension_numbers<[1], [0], [0], [1], [0, 0, 1, 1], [], []>} : vector<8x512xf32>, vector<512x128xf32>, vector<8x128xf32> -> vector<8x128xf32>
    %c0_3 = arith.constant 0 : index
    %c0_4 = arith.constant 0 : index
    %3 = vector.load %arg4[%c0_3, %c0_4] : memref<1x128xf32, #tpu.memory_space<vmem>>, vector<1x128xf32>
    %4 = vector.broadcast %3 : vector<1x128xf32> to vector<8x128xf32>
    %5 = arith.addf %2, %4 : vector<8x128xf32>
    %c0_5 = arith.constant 0 : index
    %c0_6 = arith.constant 0 : index
    %6 = vector.load %arg9[%c0_5, %c0_6] : memref<8x128xf32, #tpu.memory_space<vmem>>, vector<8x128xf32>
    tpu.vector_store %arg9[%c0_5, %c0_6], %5 {strides = array<i32>} : memref<8x128xf32, #tpu.memory_space<vmem>>, vector<8x128xf32>,
    %c0_7 = arith.constant 0 : index
    %c0_8 = arith.constant 0 : index
    %7 = vector.load %arg3[%c0_7, %c0_8] : memref<128x128xf32, #tpu.memory_space<vmem>>, vector<128x128xf32>
    %c0_9 = arith.constant 0 : index
    %c0_10 = arith.constant 0 : index
    %8 = vector.load %arg5[%c0_9, %c0_10] : memref<128x128xf32, #tpu.memory_space<vmem>>, vector<128x128xf32>
    %c0_11 = arith.constant 0 : index
    %c0_12 = arith.constant 0 : index
    %9 = vector.load %arg6[%c0_11, %c0_12] : memref<128x128xf32, #tpu.memory_space<vmem>>, vector<128x128xf32>
    %c0_13 = arith.constant 0 : index
    %c0_14 = arith.constant 0 : index
    %10 = vector.load %arg7[%c0_13, %c0_14] : memref<1x128xf32, #tpu.memory_space<vmem>>, vector<1x128xf32>
    %cst_15 = arith.constant 0.000000e+00 : f32
    %11 = vector.broadcast %cst_15 : f32 to vector<8x128xf32>
    %c0_i32 = arith.constant 0 : i32
    %12 = arith.index_cast %c0_i32 : i32 to index
    %c0_16 = arith.constant 0 : index
    %13 = vector.load %arg9[%12, %c0_16] : memref<8x128xf32, #tpu.memory_space<vmem>>, vector<1x128xf32>
    %cst_17 = arith.constant dense<0.000000e+00> : vector<8x128xf32>
    %14 = tpu.matmul %11, %7, %cst_17 {dimension_numbers = #tpu.dot_dimension_numbers<[1], [0], [0], [1], [0, 0, 1, 1], [], []>} : vector<8x128xf32>, vector<128x128xf32>, vector<8x128xf32> -> vector<8x128xf32>
    %15 = vector.broadcast %13 : vector<1x128xf32> to vector<8x128xf32>
    %16 = arith.addf %15, %14 : vector<8x128xf32>
    %cst_18 = arith.constant 0.000000e+00 : f32
    %17 = vector.broadcast %cst_18 : f32 to vector<8x128xf32>
    %18 = arith.maximumf %16, %17 : vector<8x128xf32>
    %cst_19 = arith.constant dense<0.000000e+00> : vector<8x128xf32>
    %19 = tpu.matmul %18, %8, %cst_19 {dimension_numbers = #tpu.dot_dimension_numbers<[1], [0], [0], [1], [0, 0, 1, 1], [], []>} : vector<8x128xf32>, vector<128x128xf32>, vector<8x128xf32> -> vector<8x128xf32>
    %cst_20 = arith.constant dense<0.000000e+00> : vector<8x128xf32>
    %20 = tpu.matmul %11, %9, %cst_20 {dimension_numbers = #tpu.dot_dimension_numbers<[1], [0], [0], [1], [0, 0, 1, 1], [], []>} : vector<8x128xf32>, vector<128x128xf32>, vector<8x128xf32> -> vector<8x128xf32>
    %21 = arith.addf %19, %20 : vector<8x128xf32>
    %22 = vector.broadcast %10 : vector<1x128xf32> to vector<8x128xf32>
    %23 = arith.addf %21, %22 : vector<8x128xf32>
    %cst_21 = arith.constant 0.000000e+00 : f32
    %24 = vector.broadcast %cst_21 : f32 to vector<8x128xf32>
    %25 = arith.maximumf %23, %24 : vector<8x128xf32>
    %c1_i32 = arith.constant 1 : i32
    %26 = arith.index_cast %c1_i32 : i32 to index
    %c0_22 = arith.constant 0 : index
    %27 = vector.load %arg9[%26, %c0_22] : memref<8x128xf32, #tpu.memory_space<vmem>>, vector<1x128xf32>
    %cst_23 = arith.constant dense<0.000000e+00> : vector<8x128xf32>
    %28 = tpu.matmul %18, %7, %cst_23 {dimension_numbers = #tpu.dot_dimension_numbers<[1], [0], [0], [1], [0, 0, 1, 1], [], []>} : vector<8x128xf32>, vector<128x128xf32>, vector<8x128xf32> -> vector<8x128xf32>
    %29 = vector.broadcast %27 : vector<1x128xf32> to vector<8x128xf32>
    %30 = arith.addf %29, %28 : vector<8x128xf32>
    %cst_24 = arith.constant 0.000000e+00 : f32
    %31 = vector.broadcast %cst_24 : f32 to vector<8x128xf32>
    %32 = arith.maximumf %30, %31 : vector<8x128xf32>
    %cst_25 = arith.constant dense<0.000000e+00> : vector<8x128xf32>
    %33 = tpu.matmul %32, %8, %cst_25 {dimension_numbers = #tpu.dot_dimension_numbers<[1], [0], [0], [1], [0, 0, 1, 1], [], []>} : vector<8x128xf32>, vector<128x128xf32>, vector<8x128xf32> -> vector<8x128xf32>
    %cst_26 = arith.constant dense<0.000000e+00> : vector<8x128xf32>
    %34 = tpu.matmul %25, %9, %cst_26 {dimension_numbers = #tpu.dot_dimension_numbers<[1], [0], [0], [1], [0, 0, 1, 1], [], []>} : vector<8x128xf32>, vector<128x128xf32>, vector<8x128xf32> -> vector<8x128xf32>
    %35 = arith.addf %33, %34 : vector<8x128xf32>
    %36 = vector.broadcast %10 : vector<1x128xf32> to vector<8x128xf32>
    %37 = arith.addf %35, %36 : vector<8x128xf32>
    %cst_27 = arith.constant 0.000000e+00 : f32
    %38 = vector.broadcast %cst_27 : f32 to vector<8x128xf32>
    %39 = arith.maximumf %37, %38 : vector<8x128xf32>
    %c2_i32 = arith.constant 2 : i32
    %40 = arith.index_cast %c2_i32 : i32 to index
    %c0_28 = arith.constant 0 : index
    %41 = vector.load %arg9[%40, %c0_28] : memref<8x128xf32, #tpu.memory_space<vmem>>, vector<1x128xf32>
    %cst_29 = arith.constant dense<0.000000e+00> : vector<8x128xf32>
    %42 = tpu.matmul %32, %7, %cst_29 {dimension_numbers = #tpu.dot_dimension_numbers<[1], [0], [0], [1], [0, 0, 1, 1], [], []>} : vector<8x128xf32>, vector<128x128xf32>, vector<8x128xf32> -> vector<8x128xf32>
    %43 = vector.broadcast %41 : vector<1x128xf32> to vector<8x128xf32>
    %44 = arith.addf %43, %42 : vector<8x128xf32>
    %cst_30 = arith.constant 0.000000e+00 : f32
    %45 = vector.broadcast %cst_30 : f32 to vector<8x128xf32>
    %46 = arith.maximumf %44, %45 : vector<8x128xf32>
    %cst_31 = arith.constant dense<0.000000e+00> : vector<8x128xf32>
    %47 = tpu.matmul %46, %8, %cst_31 {dimension_numbers = #tpu.dot_dimension_numbers<[1], [0], [0], [1], [0, 0, 1, 1], [], []>} : vector<8x128xf32>, vector<128x128xf32>, vector<8x128xf32> -> vector<8x128xf32>
    %cst_32 = arith.constant dense<0.000000e+00> : vector<8x128xf32>
    %48 = tpu.matmul %39, %9, %cst_32 {dimension_numbers = #tpu.dot_dimension_numbers<[1], [0], [0], [1], [0, 0, 1, 1], [], []>} : vector<8x128xf32>, vector<128x128xf32>, vector<8x128xf32> -> vector<8x128xf32>
    %49 = arith.addf %47, %48 : vector<8x128xf32>
    %50 = vector.broadcast %10 : vector<1x128xf32> to vector<8x128xf32>
    %51 = arith.addf %49, %50 : vector<8x128xf32>
    %cst_33 = arith.constant 0.000000e+00 : f32
    %52 = vector.broadcast %cst_33 : f32 to vector<8x128xf32>
    %53 = arith.maximumf %51, %52 : vector<8x128xf32>
    %c3_i32 = arith.constant 3 : i32
    %54 = arith.index_cast %c3_i32 : i32 to index
    %c0_34 = arith.constant 0 : index
    %55 = vector.load %arg9[%54, %c0_34] : memref<8x128xf32, #tpu.memory_space<vmem>>, vector<1x128xf32>
    %cst_35 = arith.constant dense<0.000000e+00> : vector<8x128xf32>
    %56 = tpu.matmul %46, %7, %cst_35 {dimension_numbers = #tpu.dot_dimension_numbers<[1], [0], [0], [1], [0, 0, 1, 1], [], []>} : vector<8x128xf32>, vector<128x128xf32>, vector<8x128xf32> -> vector<8x128xf32>
    %57 = vector.broadcast %55 : vector<1x128xf32> to vector<8x128xf32>
    %58 = arith.addf %57, %56 : vector<8x128xf32>
    %cst_36 = arith.constant 0.000000e+00 : f32
    %59 = vector.broadcast %cst_36 : f32 to vector<8x128xf32>
    %60 = arith.maximumf %58, %59 : vector<8x128xf32>
    %cst_37 = arith.constant dense<0.000000e+00> : vector<8x128xf32>
    %61 = tpu.matmul %60, %8, %cst_37 {dimension_numbers = #tpu.dot_dimension_numbers<[1], [0], [0], [1], [0, 0, 1, 1], [], []>} : vector<8x128xf32>, vector<128x128xf32>, vector<8x128xf32> -> vector<8x128xf32>
    %cst_38 = arith.constant dense<0.000000e+00> : vector<8x128xf32>
    %62 = tpu.matmul %53, %9, %cst_38 {dimension_numbers = #tpu.dot_dimension_numbers<[1], [0], [0], [1], [0, 0, 1, 1], [], []>} : vector<8x128xf32>, vector<128x128xf32>, vector<8x128xf32> -> vector<8x128xf32>
    %63 = arith.addf %61, %62 : vector<8x128xf32>
    %64 = vector.broadcast %10 : vector<1x128xf32> to vector<8x128xf32>
    %65 = arith.addf %63, %64 : vector<8x128xf32>
    %cst_39 = arith.constant 0.000000e+00 : f32
    %66 = vector.broadcast %cst_39 : f32 to vector<8x128xf32>
    %67 = arith.maximumf %65, %66 : vector<8x128xf32>
    %c4_i32 = arith.constant 4 : i32
    %68 = arith.index_cast %c4_i32 : i32 to index
    %c0_40 = arith.constant 0 : index
    %69 = vector.load %arg9[%68, %c0_40] : memref<8x128xf32, #tpu.memory_space<vmem>>, vector<1x128xf32>
    %cst_41 = arith.constant dense<0.000000e+00> : vector<8x128xf32>
    %70 = tpu.matmul %60, %7, %cst_41 {dimension_numbers = #tpu.dot_dimension_numbers<[1], [0], [0], [1], [0, 0, 1, 1], [], []>} : vector<8x128xf32>, vector<128x128xf32>, vector<8x128xf32> -> vector<8x128xf32>
    %71 = vector.broadcast %69 : vector<1x128xf32> to vector<8x128xf32>
    %72 = arith.addf %71, %70 : vector<8x128xf32>
    %cst_42 = arith.constant 0.000000e+00 : f32
    %73 = vector.broadcast %cst_42 : f32 to vector<8x128xf32>
    %74 = arith.maximumf %72, %73 : vector<8x128xf32>
    %cst_43 = arith.constant dense<0.000000e+00> : vector<8x128xf32>
    %75 = tpu.matmul %74, %8, %cst_43 {dimension_numbers = #tpu.dot_dimension_numbers<[1], [0], [0], [1], [0, 0, 1, 1], [], []>} : vector<8x128xf32>, vector<128x128xf32>, vector<8x128xf32> -> vector<8x128xf32>
    %cst_44 = arith.constant dense<0.000000e+00> : vector<8x128xf32>
    %76 = tpu.matmul %67, %9, %cst_44 {dimension_numbers = #tpu.dot_dimension_numbers<[1], [0], [0], [1], [0, 0, 1, 1], [], []>} : vector<8x128xf32>, vector<128x128xf32>, vector<8x128xf32> -> vector<8x128xf32>
    %77 = arith.addf %75, %76 : vector<8x128xf32>
    %78 = vector.broadcast %10 : vector<1x128xf32> to vector<8x128xf32>
    %79 = arith.addf %77, %78 : vector<8x128xf32>
    %cst_45 = arith.constant 0.000000e+00 : f32
    %80 = vector.broadcast %cst_45 : f32 to vector<8x128xf32>
    %81 = arith.maximumf %79, %80 : vector<8x128xf32>
    %c5_i32 = arith.constant 5 : i32
    %82 = arith.index_cast %c5_i32 : i32 to index
    %c0_46 = arith.constant 0 : index
    %83 = vector.load %arg9[%82, %c0_46] : memref<8x128xf32, #tpu.memory_space<vmem>>, vector<1x128xf32>
    %cst_47 = arith.constant dense<0.000000e+00> : vector<8x128xf32>
    %84 = tpu.matmul %74, %7, %cst_47 {dimension_numbers = #tpu.dot_dimension_numbers<[1], [0], [0], [1], [0, 0, 1, 1], [], []>} : vector<8x128xf32>, vector<128x128xf32>, vector<8x128xf32> -> vector<8x128xf32>
    %85 = vector.broadcast %83 : vector<1x128xf32> to vector<8x128xf32>
    %86 = arith.addf %85, %84 : vector<8x128xf32>
    %cst_48 = arith.constant 0.000000e+00 : f32
    %87 = vector.broadcast %cst_48 : f32 to vector<8x128xf32>
    %88 = arith.maximumf %86, %87 : vector<8x128xf32>
    %cst_49 = arith.constant dense<0.000000e+00> : vector<8x128xf32>
    %89 = tpu.matmul %88, %8, %cst_49 {dimension_numbers = #tpu.dot_dimension_numbers<[1], [0], [0], [1], [0, 0, 1, 1], [], []>} : vector<8x128xf32>, vector<128x128xf32>, vector<8x128xf32> -> vector<8x128xf32>
    %cst_50 = arith.constant dense<0.000000e+00> : vector<8x128xf32>
    %90 = tpu.matmul %81, %9, %cst_50 {dimension_numbers = #tpu.dot_dimension_numbers<[1], [0], [0], [1], [0, 0, 1, 1], [], []>} : vector<8x128xf32>, vector<128x128xf32>, vector<8x128xf32> -> vector<8x128xf32>
    %91 = arith.addf %89, %90 : vector<8x128xf32>
    %92 = vector.broadcast %10 : vector<1x128xf32> to vector<8x128xf32>
    %93 = arith.addf %91, %92 : vector<8x128xf32>
    %cst_51 = arith.constant 0.000000e+00 : f32
    %94 = vector.broadcast %cst_51 : f32 to vector<8x128xf32>
    %95 = arith.maximumf %93, %94 : vector<8x128xf32>
    %c6_i32 = arith.constant 6 : i32
    %96 = arith.index_cast %c6_i32 : i32 to index
    %c0_52 = arith.constant 0 : index
    %97 = vector.load %arg9[%96, %c0_52] : memref<8x128xf32, #tpu.memory_space<vmem>>, vector<1x128xf32>
    %cst_53 = arith.constant dense<0.000000e+00> : vector<8x128xf32>
    %98 = tpu.matmul %88, %7, %cst_53 {dimension_numbers = #tpu.dot_dimension_numbers<[1], [0], [0], [1], [0, 0, 1, 1], [], []>} : vector<8x128xf32>, vector<128x128xf32>, vector<8x128xf32> -> vector<8x128xf32>
    %99 = vector.broadcast %97 : vector<1x128xf32> to vector<8x128xf32>
    %100 = arith.addf %99, %98 : vector<8x128xf32>
    %cst_54 = arith.constant 0.000000e+00 : f32
    %101 = vector.broadcast %cst_54 : f32 to vector<8x128xf32>
    %102 = arith.maximumf %100, %101 : vector<8x128xf32>
    %cst_55 = arith.constant dense<0.000000e+00> : vector<8x128xf32>
    %103 = tpu.matmul %102, %8, %cst_55 {dimension_numbers = #tpu.dot_dimension_numbers<[1], [0], [0], [1], [0, 0, 1, 1], [], []>} : vector<8x128xf32>, vector<128x128xf32>, vector<8x128xf32> -> vector<8x128xf32>
    %cst_56 = arith.constant dense<0.000000e+00> : vector<8x128xf32>
    %104 = tpu.matmul %95, %9, %cst_56 {dimension_numbers = #tpu.dot_dimension_numbers<[1], [0], [0], [1], [0, 0, 1, 1], [], []>} : vector<8x128xf32>, vector<128x128xf32>, vector<8x128xf32> -> vector<8x128xf32>
    %105 = arith.addf %103, %104 : vector<8x128xf32>
    %106 = vector.broadcast %10 : vector<1x128xf32> to vector<8x128xf32>
    %107 = arith.addf %105, %106 : vector<8x128xf32>
    %cst_57 = arith.constant 0.000000e+00 : f32
    %108 = vector.broadcast %cst_57 : f32 to vector<8x128xf32>
    %109 = arith.maximumf %107, %108 : vector<8x128xf32>
    %c7_i32 = arith.constant 7 : i32
    %110 = arith.index_cast %c7_i32 : i32 to index
    %c0_58 = arith.constant 0 : index
    %111 = vector.load %arg9[%110, %c0_58] : memref<8x128xf32, #tpu.memory_space<vmem>>, vector<1x128xf32>
    %cst_59 = arith.constant dense<0.000000e+00> : vector<8x128xf32>
    %112 = tpu.matmul %102, %7, %cst_59 {dimension_numbers = #tpu.dot_dimension_numbers<[1], [0], [0], [1], [0, 0, 1, 1], [], []>} : vector<8x128xf32>, vector<128x128xf32>, vector<8x128xf32> -> vector<8x128xf32>
    %113 = vector.broadcast %111 : vector<1x128xf32> to vector<8x128xf32>
    %114 = arith.addf %113, %112 : vector<8x128xf32>
    %cst_60 = arith.constant 0.000000e+00 : f32
    %115 = vector.broadcast %cst_60 : f32 to vector<8x128xf32>
    %116 = arith.maximumf %114, %115 : vector<8x128xf32>
    %cst_61 = arith.constant dense<0.000000e+00> : vector<8x128xf32>
    %117 = tpu.matmul %116, %8, %cst_61 {dimension_numbers = #tpu.dot_dimension_numbers<[1], [0], [0], [1], [0, 0, 1, 1], [], []>} : vector<8x128xf32>, vector<128x128xf32>, vector<8x128xf32> -> vector<8x128xf32>
    %cst_62 = arith.constant dense<0.000000e+00> : vector<8x128xf32>
    %118 = tpu.matmul %109, %9, %cst_62 {dimension_numbers = #tpu.dot_dimension_numbers<[1], [0], [0], [1], [0, 0, 1, 1], [], []>} : vector<8x128xf32>, vector<128x128xf32>, vector<8x128xf32> -> vector<8x128xf32>
    %119 = arith.addf %117, %118 : vector<8x128xf32>
    %120 = vector.broadcast %10 : vector<1x128xf32> to vector<8x128xf32>
    %121 = arith.addf %119, %120 : vector<8x128xf32>
    %cst_63 = arith.constant 0.000000e+00 : f32
    %122 = vector.broadcast %cst_63 : f32 to vector<8x128xf32>
    %123 = arith.maximumf %121, %122 : vector<8x128xf32>
    %c8_i32 = arith.constant 8 : i32
    %c0_64 = arith.constant 0 : index
    %c0_65 = arith.constant 0 : index
    %c0_66 = arith.constant 0 : index
    %124 = vector.load %arg8[%c0_64, %c0_65, %c0_66] : memref<2x8x128xf32, #tpu.memory_space<vmem>>, vector<1x8x128xf32>
    %125 = vector.shape_cast %124 : vector<1x8x128xf32> to vector<8x128xf32>
    %126 = vector.shape_cast %116 : vector<8x128xf32> to vector<1x8x128xf32>
    tpu.vector_store %arg8[%c0_64, %c0_65, %c0_66], %126 {strides = array<i32>} : memref<2x8x128xf32, #tpu.memory_space<vmem>>, vector<1x8x128xf32>,
    %c1 = arith.constant 1 : index
    %c0_67 = arith.constant 0 : index
    %c0_68 = arith.constant 0 : index
    %127 = vector.load %arg8[%c1, %c0_67, %c0_68] : memref<2x8x128xf32, #tpu.memory_space<vmem>>, vector<1x8x128xf32>
    %128 = vector.shape_cast %127 : vector<1x8x128xf32> to vector<8x128xf32>
    %129 = vector.shape_cast %123 : vector<8x128xf32> to vector<1x8x128xf32>
    tpu.vector_store %arg8[%c1, %c0_67, %c0_68], %129 {strides = array<i32>} : memref<2x8x128xf32, #tpu.memory_space<vmem>>, vector<1x8x128xf32>,
    return
  }
  func.func @transform_0(%arg0: i32) -> (i32, i32) {
    %c0_i32 = arith.constant 0 : i32
    %c0_i32_0 = arith.constant 0 : i32
    %c0_i32_1 = arith.constant 0 : i32
    return %c0_i32, %c0_i32_0 : i32, i32
  }
  func.func @transform_1(%arg0: i32) -> (i32, i32) {
    %c0_i32 = arith.constant 0 : i32
    %c0_i32_0 = arith.constant 0 : i32
    %c0_i32_1 = arith.constant 0 : i32
    return %c0_i32, %c0_i32_0 : i32, i32
  }
  func.func @transform_2(%arg0: i32) -> (i32, i32) {
    %c0_i32 = arith.constant 0 : i32
    %c0_i32_0 = arith.constant 0 : i32
    %c0_i32_1 = arith.constant 0 : i32
    return %c0_i32, %c0_i32_0 : i32, i32
  }
  func.func @transform_3(%arg0: i32) -> (i32, i32) {
    %c0_i32 = arith.constant 0 : i32
    %c0_i32_0 = arith.constant 0 : i32
    %c0_i32_1 = arith.constant 0 : i32
    return %c0_i32, %c0_i32_0 : i32, i32
  }
  func.func @transform_4(%arg0: i32) -> (i32, i32) {
    %c0_i32 = arith.constant 0 : i32
    %c0_i32_0 = arith.constant 0 : i32
    %c0_i32_1 = arith.constant 0 : i32
    return %c0_i32, %c0_i32_0 : i32, i32
  }
  func.func @transform_5(%arg0: i32) -> (i32, i32) {
    %c0_i32 = arith.constant 0 : i32
    %c0_i32_0 = arith.constant 0 : i32
    %c0_i32_1 = arith.constant 0 : i32
    return %c0_i32, %c0_i32_0 : i32, i32
  }
  func.func @transform_6(%arg0: i32) -> (i32, i32) {
    %c0_i32 = arith.constant 0 : i32
    %c0_i32_0 = arith.constant 0 : i32
    %c0_i32_1 = arith.constant 0 : i32
    return %c0_i32, %c0_i32_0 : i32, i32
  }
  func.func @transform_7(%arg0: i32) -> (i32, i32, i32) {
    %c0_i32 = arith.constant 0 : i32
    %c0_i32_0 = arith.constant 0 : i32
    %c0_i32_1 = arith.constant 0 : i32
    %c0_i32_2 = arith.constant 0 : i32
    return %c0_i32, %c0_i32_0, %c0_i32_1 : i32, i32, i32
  }
}

</mosaic_0001>

<llo_original>
// kernel: rnn_forward.1
$region0: #{rnn_forward.1}
  #allocation0 [shape = 'u32[]', space=smem, size = 0x4, offset = 0x4, fixed_abs, tag = 'smem constant byte address 0x4 - core index']
  #allocation1 [shape = 'u32[144,128]{1,0:T(1,128)}', space=vmem, size = 0x12000, scoped, tag = 'internal scratch']
  #allocation2 [shape = 'f32[8,128]{1,0:T(8,128)}', space=vmem, size = 0x1000, scoped, tag = 'scratch operand']
  %s0 = inlined_call_operand.vmem [shape: f32[8,512], index: 0, kind: input, shape index: {}]
  %s1 = inlined_call_operand.vmem [shape: f32[512,128], index: 1, kind: input, shape index: {}]
  %s2 = inlined_call_operand.vmem [shape: f32[128,128], index: 2, kind: input, shape index: {}]
  %s3 = inlined_call_operand.vmem [shape: f32[1,128], index: 3, kind: input, shape index: {}]
  %s4 = inlined_call_operand.vmem [shape: f32[128,128], index: 4, kind: input, shape index: {}]
  %s5 = inlined_call_operand.vmem [shape: f32[128,128], index: 5, kind: input, shape index: {}]
  %s6 = inlined_call_operand.vmem [shape: f32[1,128], index: 6, kind: input, shape index: {}]
  %s7 = inlined_call_operand.vmem [shape: f32[2,8,128], index: 7, kind: output, shape index: {}]
  %s8 = sld [smem:[#allocation0]]
  $region38: #{rnn_forward.1} parent=0
    _
  %s10 = ssub.s32 1, %s8
  %s11 = scalar_select 0, %s10, %s8
  // Predicated region
  $region2: #{rnn_forward.1} parent=0 // pred_check
    _
  $region3: #{rnn_forward.1} parent=0 // pred_check_branch
    %13 = sbr.rel (0) target = $region5
  $region4: #{rnn_forward.1} parent=0 // pred_region
    _
  $region5: #{rnn_forward.1} parent=0 // pred_fallthru
    _
  // Predicated region
  $region6: #{rnn_forward.1} parent=0 // pred_check
    _
  $region7: #{rnn_forward.1} parent=0 // pred_check_branch
    %15 = sbr.rel (0) target = $region9
  $region8: #{rnn_forward.1} parent=0 // pred_region
    _
  $region9: #{rnn_forward.1} parent=0 // pred_fallthru
    _
  // Predicated region
  $region10: #{rnn_forward.1} parent=0 // pred_check
    _
  $region11: #{rnn_forward.1} parent=0 // pred_check_branch
    %17 = sbr.rel (0) target = $region13
  $region12: #{rnn_forward.1} parent=0 // pred_region
    _
  $region13: #{rnn_forward.1} parent=0 // pred_fallthru
    _
  // Predicated region
  $region14: #{rnn_forward.1} parent=0 // pred_check
    _
  $region15: #{rnn_forward.1} parent=0 // pred_check_branch
    %19 = sbr.rel (0) target = $region17
  $region16: #{rnn_forward.1} parent=0 // pred_region
    _
  $region17: #{rnn_forward.1} parent=0 // pred_fallthru
    _
  // Predicated region
  $region18: #{rnn_forward.1} parent=0 // pred_check
    _
  $region19: #{rnn_forward.1} parent=0 // pred_check_branch
    %21 = sbr.rel (0) target = $region21
  $region20: #{rnn_forward.1} parent=0 // pred_region
    _
  $region21: #{rnn_forward.1} parent=0 // pred_fallthru
    _
  // Predicated region
  $region22: #{rnn_forward.1} parent=0 // pred_check
    _
  $region23: #{rnn_forward.1} parent=0 // pred_check_branch
    %23 = sbr.rel (0) target = $region25
  $region24: #{rnn_forward.1} parent=0 // pred_region
    _
  $region25: #{rnn_forward.1} parent=0 // pred_fallthru
    _
  // Predicated region
  $region26: #{rnn_forward.1} parent=0 // pred_check
    _
  $region27: #{rnn_forward.1} parent=0 // pred_check_branch
    %25 = sbr.rel (0) target = $region29
  $region28: #{rnn_forward.1} parent=0 // pred_region
    _
  $region29: #{rnn_forward.1} parent=0 // pred_fallthru
    _
  %v26 = vld [vmem:[%s0] sm:$0xff]
  %v27 = vld [vmem:[%s0 + $0x8] sm:$0xff]
  %v28 = vld [vmem:[%s0 + $0x10] sm:$0xff]
  %v29 = vld [vmem:[%s0 + $0x18] sm:$0xff]
  %v30 = vld [vmem:[%s1] sm:$0xff]
  %v31 = vld [vmem:[%s1 + $0x8] sm:$0xff]
  %v32 = vld [vmem:[%s1 + $0x10] sm:$0xff]
  %v33 = vld [vmem:[%s1 + $0x18] sm:$0xff]
  %v34 = vld [vmem:[%s1 + $0x20] sm:$0xff]
  %v35 = vld [vmem:[%s1 + $0x28] sm:$0xff]
  %v36 = vld [vmem:[%s1 + $0x30] sm:$0xff]
  %v37 = vld [vmem:[%s1 + $0x38] sm:$0xff]
  %v38 = vld [vmem:[%s1 + $0x40] sm:$0xff]
  %v39 = vld [vmem:[%s1 + $0x48] sm:$0xff]
  %v40 = vld [vmem:[%s1 + $0x50] sm:$0xff]
  %v41 = vld [vmem:[%s1 + $0x58] sm:$0xff]
  %v42 = vld [vmem:[%s1 + $0x60] sm:$0xff]
  %v43 = vld [vmem:[%s1 + $0x68] sm:$0xff]
  %v44 = vld [vmem:[%s1 + $0x70] sm:$0xff]
  %v45 = vld [vmem:[%s1 + $0x78] sm:$0xff]
  %v46 = vld [vmem:[%s1 + $0x80] sm:$0xff]
  %v47 = vld [vmem:[%s1 + $0x88] sm:$0xff]
  %v48 = vld [vmem:[%s1 + $0x90] sm:$0xff]
  %v49 = vld [vmem:[%s1 + $0x98] sm:$0xff]
  %v50 = vld [vmem:[%s1 + $0xa0] sm:$0xff]
  %v51 = vld [vmem:[%s1 + $0xa8] sm:$0xff]
  %v52 = vld [vmem:[%s1 + $0xb0] sm:$0xff]
  %v53 = vld [vmem:[%s1 + $0xb8] sm:$0xff]
  %v54 = vld [vmem:[%s1 + $0xc0] sm:$0xff]
  %v55 = vld [vmem:[%s1 + $0xc8] sm:$0xff]
  %v56 = vld [vmem:[%s1 + $0xd0] sm:$0xff]
  %v57 = vld [vmem:[%s1 + $0xd8] sm:$0xff]
  %v58 = vld [vmem:[%s1 + $0xe0] sm:$0xff]
  %v59 = vld [vmem:[%s1 + $0xe8] sm:$0xff]
  %v60 = vld [vmem:[%s1 + $0xf0] sm:$0xff]
  %v61 = vld [vmem:[%s1 + $0xf8] sm:$0xff]
  %v62 = vld [vmem:[%s1 + $0x100] sm:$0xff]
  %v63 = vld [vmem:[%s1 + $0x108] sm:$0xff]
  %v64 = vld [vmem:[%s1 + $0x110] sm:$0xff]
  %v65 = vld [vmem:[%s1 + $0x118] sm:$0xff]
  %v66 = vld [vmem:[%s1 + $0x120] sm:$0xff]
  %v67 = vld [vmem:[%s1 + $0x128] sm:$0xff]
  %v68 = vld [vmem:[%s1 + $0x130] sm:$0xff]
  %v69 = vld [vmem:[%s1 + $0x138] sm:$0xff]
  %v70 = vld [vmem:[%s1 + $0x140] sm:$0xff]
  %v71 = vld [vmem:[%s1 + $0x148] sm:$0xff]
  %v72 = vld [vmem:[%s1 + $0x150] sm:$0xff]
  %v73 = vld [vmem:[%s1 + $0x158] sm:$0xff]
  %v74 = vld [vmem:[%s1 + $0x160] sm:$0xff]
  %v75 = vld [vmem:[%s1 + $0x168] sm:$0xff]
  %v76 = vld [vmem:[%s1 + $0x170] sm:$0xff]
  %v77 = vld [vmem:[%s1 + $0x178] sm:$0xff]
  %v78 = vld [vmem:[%s1 + $0x180] sm:$0xff]
  %v79 = vld [vmem:[%s1 + $0x188] sm:$0xff]
  %v80 = vld [vmem:[%s1 + $0x190] sm:$0xff]
  %v81 = vld [vmem:[%s1 + $0x198] sm:$0xff]
  %v82 = vld [vmem:[%s1 + $0x1a0] sm:$0xff]
  %v83 = vld [vmem:[%s1 + $0x1a8] sm:$0xff]
  %v84 = vld [vmem:[%s1 + $0x1b0] sm:$0xff]
  %v85 = vld [vmem:[%s1 + $0x1b8] sm:$0xff]
  %v86 = vld [vmem:[%s1 + $0x1c0] sm:$0xff]
  %v87 = vld [vmem:[%s1 + $0x1c8] sm:$0xff]
  %v88 = vld [vmem:[%s1 + $0x1d0] sm:$0xff]
  %v89 = vld [vmem:[%s1 + $0x1d8] sm:$0xff]
  %v90 = vld [vmem:[%s1 + $0x1e0] sm:$0xff]
  %v91 = vld [vmem:[%s1 + $0x1e8] sm:$0xff]
  %v92 = vld [vmem:[%s1 + $0x1f0] sm:$0xff]
  %v93 = vld [vmem:[%s1 + $0x1f8] sm:$0xff]
  %v94 = vld [vmem:[%s3] sm:$0x1]
  %v96 = vlaneseq
  %v97 = vshrl.u32 %v96, 7
  %v98 = vsub.s32 0, %v97
  %v99 = vrot.slane %v94, %v98
  %101 = vmatprep.subr.mxu0 0.0
  %102 = vmatpush1.msra.mxu0 %v30
  %103 = vmatprep.subr.mxu0 0.0
  %104 = vmatpush1.msra.mxu0 %v31
  %105 = vmatprep.subr.mxu0 0.0
  %106 = vmatpush1.msra.mxu0 %v32
  %107 = vmatprep.subr.mxu0 0.0
  %108 = vmatpush1.msra.mxu0 %v33
  %109 = vmatprep.subr.mxu0 0.0
  %110 = vmatpush1.msra.mxu0 %v34
  %111 = vmatprep.subr.mxu0 0.0
  %112 = vmatpush1.msra.mxu0 %v35
  %113 = vmatprep.subr.mxu0 0.0
  %114 = vmatpush1.msra.mxu0 %v36
  %115 = vmatprep.subr.mxu0 0.0
  %116 = vmatpush1.msra.mxu0 %v37
  %117 = vmatprep.subr.mxu0 0.0
  %118 = vmatpush1.msra.mxu0 %v38
  %119 = vmatprep.subr.mxu0 0.0
  %120 = vmatpush1.msra.mxu0 %v39
  %121 = vmatprep.subr.mxu0 0.0
  %122 = vmatpush1.msra.mxu0 %v40
  %123 = vmatprep.subr.mxu0 0.0
  %124 = vmatpush1.msra.mxu0 %v41
  %125 = vmatprep.subr.mxu0 0.0
  %126 = vmatpush1.msra.mxu0 %v42
  %127 = vmatprep.subr.mxu0 0.0
  %128 = vmatpush1.msra.mxu0 %v43
  %129 = vmatprep.subr.mxu0 0.0
  %130 = vmatpush1.msra.mxu0 %v44
  %131 = vmatprep.subr.mxu0 0.0
  %132 = vmatpush1.msra.mxu0 %v45
  %133 = vmatprep.subr.mxu0 0.0
  %134 = vmatpush1.msra.mxu0 %v46
  %135 = vmatprep.subr.mxu0 0.0
  %136 = vmatpush1.msra.mxu0 %v47
  %137 = vmatprep.subr.mxu0 0.0
  %138 = vmatpush1.msra.mxu0 %v48
  %139 = vmatprep.subr.mxu0 0.0
  %140 = vmatpush1.msra.mxu0 %v49
  %141 = vmatprep.subr.mxu0 0.0
  %142 = vmatpush1.msra.mxu0 %v50
  %143 = vmatprep.subr.mxu0 0.0
  %144 = vmatpush1.msra.mxu0 %v51
  %145 = vmatprep.subr.mxu0 0.0
  %146 = vmatpush1.msra.mxu0 %v52
  %147 = vmatprep.subr.mxu0 0.0
  %148 = vmatpush1.msra.mxu0 %v53
  %149 = vmatprep.subr.mxu0 0.0
  %150 = vmatpush1.msra.mxu0 %v54
  %151 = vmatprep.subr.mxu0 0.0
  %152 = vmatpush1.msra.mxu0 %v55
  %153 = vmatprep.subr.mxu0 0.0
  %154 = vmatpush1.msra.mxu0 %v56
  %155 = vmatprep.subr.mxu0 0.0
  %156 = vmatpush1.msra.mxu0 %v57
  %157 = vmatprep.subr.mxu0 0.0
  %158 = vmatpush1.msra.mxu0 %v58
  %159 = vmatprep.subr.mxu0 0.0
  %160 = vmatpush1.msra.mxu0 %v59
  %161 = vmatprep.subr.mxu0 0.0
  %162 = vmatpush1.msra.mxu0 %v60
  %163 = vmatprep.subr.mxu0 0.0
  %164 = vmatpush1.msra.mxu0 %v61
  %165 = vmatprep.mubr.f32.mxu0 %v27
  %166 = vmatmul.mubr.f32.gmra.mrb[0].mxu0 %v26
  %v167 = vpop.f32.mrb[0].mxu0
  %v168 = vadd.f32 %v99, %v167
  %v169 = vpop.f32.mrb[0].mxu0
  %170 = vdwg.mxu0
  %171 = vmatprep.subr.mxu0 0.0
  %172 = vmatpush1.msra.mxu0 %v62
  %173 = vmatprep.subr.mxu0 0.0
  %174 = vmatpush1.msra.mxu0 %v63
  %175 = vmatprep.subr.mxu0 0.0
  %176 = vmatpush1.msra.mxu0 %v64
  %177 = vmatprep.subr.mxu0 0.0
  %178 = vmatpush1.msra.mxu0 %v65
  %179 = vmatprep.subr.mxu0 0.0
  %180 = vmatpush1.msra.mxu0 %v66
  %181 = vmatprep.subr.mxu0 0.0
  %182 = vmatpush1.msra.mxu0 %v67
  %183 = vmatprep.subr.mxu0 0.0
  %184 = vmatpush1.msra.mxu0 %v68
  %185 = vmatprep.subr.mxu0 0.0
  %186 = vmatpush1.msra.mxu0 %v69
  %187 = vmatprep.subr.mxu0 0.0
  %188 = vmatpush1.msra.mxu0 %v70
  %189 = vmatprep.subr.mxu0 0.0
  %190 = vmatpush1.msra.mxu0 %v71
  %191 = vmatprep.subr.mxu0 0.0
  %192 = vmatpush1.msra.mxu0 %v72
  %193 = vmatprep.subr.mxu0 0.0
  %194 = vmatpush1.msra.mxu0 %v73
  %195 = vmatprep.subr.mxu0 0.0
  %196 = vmatpush1.msra.mxu0 %v74
  %197 = vmatprep.subr.mxu0 0.0
  %198 = vmatpush1.msra.mxu0 %v75
  %199 = vmatprep.subr.mxu0 0.0
  %200 = vmatpush1.msra.mxu0 %v76
  %201 = vmatprep.subr.mxu0 0.0
  %202 = vmatpush1.msra.mxu0 %v77
  %203 = vmatprep.subr.mxu0 0.0
  %204 = vmatpush1.msra.mxu0 %v78
  %205 = vmatprep.subr.mxu0 0.0
  %206 = vmatpush1.msra.mxu0 %v79
  %207 = vmatprep.subr.mxu0 0.0
  %208 = vmatpush1.msra.mxu0 %v80
  %209 = vmatprep.subr.mxu0 0.0
  %210 = vmatpush1.msra.mxu0 %v81
  %211 = vmatprep.subr.mxu0 0.0
  %212 = vmatpush1.msra.mxu0 %v82
  %213 = vmatprep.subr.mxu0 0.0
  %214 = vmatpush1.msra.mxu0 %v83
  %215 = vmatprep.subr.mxu0 0.0
  %216 = vmatpush1.msra.mxu0 %v84
  %217 = vmatprep.subr.mxu0 0.0
  %218 = vmatpush1.msra.mxu0 %v85
  %219 = vmatprep.subr.mxu0 0.0
  %220 = vmatpush1.msra.mxu0 %v86
  %221 = vmatprep.subr.mxu0 0.0
  %222 = vmatpush1.msra.mxu0 %v87
  %223 = vmatprep.subr.mxu0 0.0
  %224 = vmatpush1.msra.mxu0 %v88
  %225 = vmatprep.subr.mxu0 0.0
  %226 = vmatpush1.msra.mxu0 %v89
  %227 = vmatprep.subr.mxu0 0.0
  %228 = vmatpush1.msra.mxu0 %v90
  %229 = vmatprep.subr.mxu0 0.0
  %230 = vmatpush1.msra.mxu0 %v91
  %231 = vmatprep.subr.mxu0 0.0
  %232 = vmatpush1.msra.mxu0 %v92
  %233 = vmatprep.subr.mxu0 0.0
  %234 = vmatpush1.msra.mxu0 %v93
  %235 = vmatprep.mubr.f32.mxu0 %v29
  %236 = vmatmul.mubr.f32.gmra.mrb[0].mxu0 %v28
  %v237 = vpop.f32.mrb[0].mxu0
  %v238 = vadd.f32 %v168, %v237
  %v239 = vpop.f32.mrb[0].mxu0
  %240 = vdwg.mxu0
  %241 = vst [vmem:[#allocation2] sm:$0xff] %v238
  %v242 = vld [vmem:[%s2] sm:$0xff]
  %v243 = vld [vmem:[%s2 + $0x8] sm:$0xff]
  %v244 = vld [vmem:[%s2 + $0x10] sm:$0xff]
  %v245 = vld [vmem:[%s2 + $0x18] sm:$0xff]
  %v246 = vld [vmem:[%s2 + $0x20] sm:$0xff]
  %v247 = vld [vmem:[%s2 + $0x28] sm:$0xff]
  %v248 = vld [vmem:[%s2 + $0x30] sm:$0xff]
  %v249 = vld [vmem:[%s2 + $0x38] sm:$0xff]
  %v250 = vld [vmem:[%s2 + $0x40] sm:$0xff]
  %v251 = vld [vmem:[%s2 + $0x48] sm:$0xff]
  %v252 = vld [vmem:[%s2 + $0x50] sm:$0xff]
  %v253 = vld [vmem:[%s2 + $0x58] sm:$0xff]
  %v254 = vld [vmem:[%s2 + $0x60] sm:$0xff]
  %v255 = vld [vmem:[%s2 + $0x68] sm:$0xff]
  %v256 = vld [vmem:[%s2 + $0x70] sm:$0xff]
  %v257 = vld [vmem:[%s2 + $0x78] sm:$0xff]
  %v258 = vld [vmem:[%s4] sm:$0xff]
  %v259 = vld [vmem:[%s4 + $0x8] sm:$0xff]
  %v260 = vld [vmem:[%s4 + $0x10] sm:$0xff]
  %v261 = vld [vmem:[%s4 + $0x18] sm:$0xff]
  %v262 = vld [vmem:[%s4 + $0x20] sm:$0xff]
  %v263 = vld [vmem:[%s4 + $0x28] sm:$0xff]
  %v264 = vld [vmem:[%s4 + $0x30] sm:$0xff]
  %v265 = vld [vmem:[%s4 + $0x38] sm:$0xff]
  %v266 = vld [vmem:[%s4 + $0x40] sm:$0xff]
  %v267 = vld [vmem:[%s4 + $0x48] sm:$0xff]
  %v268 = vld [vmem:[%s4 + $0x50] sm:$0xff]
  %v269 = vld [vmem:[%s4 + $0x58] sm:$0xff]
  %v270 = vld [vmem:[%s4 + $0x60] sm:$0xff]
  %v271 = vld [vmem:[%s4 + $0x68] sm:$0xff]
  %v272 = vld [vmem:[%s4 + $0x70] sm:$0xff]
  %v273 = vld [vmem:[%s4 + $0x78] sm:$0xff]
  %v274 = vld [vmem:[%s5] sm:$0xff]
  %v275 = vld [vmem:[%s5 + $0x8] sm:$0xff]
  %v276 = vld [vmem:[%s5 + $0x10] sm:$0xff]
  %v277 = vld [vmem:[%s5 + $0x18] sm:$0xff]
  %v278 = vld [vmem:[%s5 + $0x20] sm:$0xff]
  %v279 = vld [vmem:[%s5 + $0x28] sm:$0xff]
  %v280 = vld [vmem:[%s5 + $0x30] sm:$0xff]
  %v281 = vld [vmem:[%s5 + $0x38] sm:$0xff]
  %v282 = vld [vmem:[%s5 + $0x40] sm:$0xff]
  %v283 = vld [vmem:[%s5 + $0x48] sm:$0xff]
  %v284 = vld [vmem:[%s5 + $0x50] sm:$0xff]
  %v285 = vld [vmem:[%s5 + $0x58] sm:$0xff]
  %v286 = vld [vmem:[%s5 + $0x60] sm:$0xff]
  %v287 = vld [vmem:[%s5 + $0x68] sm:$0xff]
  %v288 = vld [vmem:[%s5 + $0x70] sm:$0xff]
  %v289 = vld [vmem:[%s5 + $0x78] sm:$0xff]
  %v290 = vld [vmem:[%s6] sm:$0x1]
  %v291 = vld [vmem:[#allocation2] sm:$0x1]
  %292 = vmatprep.subr.mxu0 0.0
  %293 = vmatpush1.msra.mxu0 %v242
  %294 = vmatprep.subr.mxu0 0.0
  %295 = vmatpush1.msra.mxu0 %v243
  %296 = vmatprep.subr.mxu0 0.0
  %297 = vmatpush1.msra.mxu0 %v244
  %298 = vmatprep.subr.mxu0 0.0
  %299 = vmatpush1.msra.mxu0 %v245
  %300 = vmatprep.subr.mxu0 0.0
  %301 = vmatpush1.msra.mxu0 %v246
  %302 = vmatprep.subr.mxu0 0.0
  %303 = vmatpush1.msra.mxu0 %v247
  %304 = vmatprep.subr.mxu0 0.0
  %305 = vmatpush1.msra.mxu0 %v248
  %306 = vmatprep.subr.mxu0 0.0
  %307 = vmatpush1.msra.mxu0 %v249
  %308 = vmatprep.subr.mxu0 0.0
  %309 = vmatpush1.msra.mxu0 %v250
  %310 = vmatprep.subr.mxu0 0.0
  %311 = vmatpush1.msra.mxu0 %v251
  %312 = vmatprep.subr.mxu0 0.0
  %313 = vmatpush1.msra.mxu0 %v252
  %314 = vmatprep.subr.mxu0 0.0
  %315 = vmatpush1.msra.mxu0 %v253
  %316 = vmatprep.subr.mxu0 0.0
  %317 = vmatpush1.msra.mxu0 %v254
  %318 = vmatprep.subr.mxu0 0.0
  %319 = vmatpush1.msra.mxu0 %v255
  %320 = vmatprep.subr.mxu0 0.0
  %321 = vmatpush1.msra.mxu0 %v256
  %322 = vmatprep.subr.mxu0 0.0
  %323 = vmatpush1.msra.mxu0 %v257
  %324 = vmatprep.subr.mxu0 0.0
  %325 = vmatpush1.msra.mxu0 0.0
  %326 = vmatprep.subr.mxu0 0.0
  %327 = vmatpush1.msra.mxu0 0.0
  %328 = vmatprep.subr.mxu0 0.0
  %329 = vmatpush1.msra.mxu0 0.0
  %330 = vmatprep.subr.mxu0 0.0
  %331 = vmatpush1.msra.mxu0 0.0
  %332 = vmatprep.subr.mxu0 0.0
  %333 = vmatpush1.msra.mxu0 0.0
  %334 = vmatprep.subr.mxu0 0.0
  %335 = vmatpush1.msra.mxu0 0.0
  %336 = vmatprep.subr.mxu0 0.0
  %337 = vmatpush1.msra.mxu0 0.0
  %338 = vmatprep.subr.mxu0 0.0
  %339 = vmatpush1.msra.mxu0 0.0
  %340 = vmatprep.subr.mxu0 0.0
  %341 = vmatpush1.msra.mxu0 0.0
  %342 = vmatprep.subr.mxu0 0.0
  %343 = vmatpush1.msra.mxu0 0.0
  %344 = vmatprep.subr.mxu0 0.0
  %345 = vmatpush1.msra.mxu0 0.0
  %346 = vmatprep.subr.mxu0 0.0
  %347 = vmatpush1.msra.mxu0 0.0
  %348 = vmatprep.subr.mxu0 0.0
  %349 = vmatpush1.msra.mxu0 0.0
  %350 = vmatprep.subr.mxu0 0.0
  %351 = vmatpush1.msra.mxu0 0.0
  %352 = vmatprep.subr.mxu0 0.0
  %353 = vmatpush1.msra.mxu0 0.0
  %354 = vmatprep.subr.mxu0 0.0
  %355 = vmatpush1.msra.mxu0 0.0
  %356 = vmatprep.mubr.f32.mxu0 0.0
  %357 = vmatmul.mubr.f32.gmra.mrb[0].mxu0 0.0
  %v358 = vpop.f32.mrb[0].mxu0
  %v359 = vadd.f32 0.0, %v358
  %v360 = vpop.f32.mrb[0].mxu0
  %361 = vdwg.mxu0
  %v362 = vlaneseq
  %v363 = vshrl.u32 %v362, 7
  %v364 = vsub.s32 0, %v363
  %v365 = vrot.slane %v291, %v364
  %v366 = vadd.f32 %v365, %v359
  %v367 = vmax.f32 %v366, 0.0
  %368 = vmatprep.subr.mxu0 0.0
  %369 = vmatpush1.msra.mxu0 %v274
  %370 = vmatprep.subr.mxu0 0.0
  %371 = vmatpush1.msra.mxu0 %v275
  %372 = vmatprep.subr.mxu0 0.0
  %373 = vmatpush1.msra.mxu0 %v276
  %374 = vmatprep.subr.mxu0 0.0
  %375 = vmatpush1.msra.mxu0 %v277
  %376 = vmatprep.subr.mxu0 0.0
  %377 = vmatpush1.msra.mxu0 %v278
  %378 = vmatprep.subr.mxu0 0.0
  %379 = vmatpush1.msra.mxu0 %v279
  %380 = vmatprep.subr.mxu0 0.0
  %381 = vmatpush1.msra.mxu0 %v280
  %382 = vmatprep.subr.mxu0 0.0
  %383 = vmatpush1.msra.mxu0 %v281
  %384 = vmatprep.subr.mxu0 0.0
  %385 = vmatpush1.msra.mxu0 %v282
  %386 = vmatprep.subr.mxu0 0.0
  %387 = vmatpush1.msra.mxu0 %v283
  %388 = vmatprep.subr.mxu0 0.0
  %389 = vmatpush1.msra.mxu0 %v284
  %390 = vmatprep.subr.mxu0 0.0
  %391 = vmatpush1.msra.mxu0 %v285
  %392 = vmatprep.subr.mxu0 0.0
  %393 = vmatpush1.msra.mxu0 %v286
  %394 = vmatprep.subr.mxu0 0.0
  %395 = vmatpush1.msra.mxu0 %v287
  %396 = vmatprep.subr.mxu0 0.0
  %397 = vmatpush1.msra.mxu0 %v288
  %398 = vmatprep.subr.mxu0 0.0
  %399 = vmatpush1.msra.mxu0 %v289
  %400 = vmatprep.subr.mxu0 0.0
  %401 = vmatpush1.msra.mxu0 0.0
  %402 = vmatprep.subr.mxu0 0.0
  %403 = vmatpush1.msra.mxu0 0.0
  %404 = vmatprep.subr.mxu0 0.0
  %405 = vmatpush1.msra.mxu0 0.0
  %406 = vmatprep.subr.mxu0 0.0
  %407 = vmatpush1.msra.mxu0 0.0
  %408 = vmatprep.subr.mxu0 0.0
  %409 = vmatpush1.msra.mxu0 0.0
  %410 = vmatprep.subr.mxu0 0.0
  %411 = vmatpush1.msra.mxu0 0.0
  %412 = vmatprep.subr.mxu0 0.0
  %413 = vmatpush1.msra.mxu0 0.0
  %414 = vmatprep.subr.mxu0 0.0
  %415 = vmatpush1.msra.mxu0 0.0
  %416 = vmatprep.subr.mxu0 0.0
  %417 = vmatpush1.msra.mxu0 0.0
  %418 = vmatprep.subr.mxu0 0.0
  %419 = vmatpush1.msra.mxu0 0.0
  %420 = vmatprep.subr.mxu0 0.0
  %421 = vmatpush1.msra.mxu0 0.0
  %422 = vmatprep.subr.mxu0 0.0
  %423 = vmatpush1.msra.mxu0 0.0
  %424 = vmatprep.subr.mxu0 0.0
  %425 = vmatpush1.msra.mxu0 0.0
  %426 = vmatprep.subr.mxu0 0.0
  %427 = vmatpush1.msra.mxu0 0.0
  %428 = vmatprep.subr.mxu0 0.0
  %429 = vmatpush1.msra.mxu0 0.0
  %430 = vmatprep.subr.mxu0 0.0
  %431 = vmatpush1.msra.mxu0 0.0
  %432 = vmatprep.mubr.f32.mxu0 0.0
  %433 = vmatmul.mubr.f32.gmra.mrb[0].mxu0 0.0
  %v434 = vpop.f32.mrb[0].mxu0
  %v435 = vadd.f32 0.0, %v434
  %v436 = vpop.f32.mrb[0].mxu0
  %437 = vdwg.mxu0
  %438 = vmatprep.subr.mxu0 0.0
  %439 = vmatpush1.msra.mxu0 %v258
  %440 = vmatprep.subr.mxu0 0.0
  %441 = vmatpush1.msra.mxu0 %v259
  %442 = vmatprep.subr.mxu0 0.0
  %443 = vmatpush1.msra.mxu0 %v260
  %444 = vmatprep.subr.mxu0 0.0
  %445 = vmatpush1.msra.mxu0 %v261
  %446 = vmatprep.subr.mxu0 0.0
  %447 = vmatpush1.msra.mxu0 %v262
  %448 = vmatprep.subr.mxu0 0.0
  %449 = vmatpush1.msra.mxu0 %v263
  %450 = vmatprep.subr.mxu0 0.0
  %451 = vmatpush1.msra.mxu0 %v264
  %452 = vmatprep.subr.mxu0 0.0
  %453 = vmatpush1.msra.mxu0 %v265
  %454 = vmatprep.subr.mxu0 0.0
  %455 = vmatpush1.msra.mxu0 %v266
  %456 = vmatprep.subr.mxu0 0.0
  %457 = vmatpush1.msra.mxu0 %v267
  %458 = vmatprep.subr.mxu0 0.0
  %459 = vmatpush1.msra.mxu0 %v268
  %460 = vmatprep.subr.mxu0 0.0
  %461 = vmatpush1.msra.mxu0 %v269
  %462 = vmatprep.subr.mxu0 0.0
  %463 = vmatpush1.msra.mxu0 %v270
  %464 = vmatprep.subr.mxu0 0.0
  %465 = vmatpush1.msra.mxu0 %v271
  %466 = vmatprep.subr.mxu0 0.0
  %467 = vmatpush1.msra.mxu0 %v272
  %468 = vmatprep.subr.mxu0 0.0
  %469 = vmatpush1.msra.mxu0 %v273
  %470 = vmatprep.subr.mxu0 0.0
  %471 = vmatpush1.msra.mxu0 0.0
  %472 = vmatprep.subr.mxu0 0.0
  %473 = vmatpush1.msra.mxu0 0.0
  %474 = vmatprep.subr.mxu0 0.0
  %475 = vmatpush1.msra.mxu0 0.0
  %476 = vmatprep.subr.mxu0 0.0
  %477 = vmatpush1.msra.mxu0 0.0
  %478 = vmatprep.subr.mxu0 0.0
  %479 = vmatpush1.msra.mxu0 0.0
  %480 = vmatprep.subr.mxu0 0.0
  %481 = vmatpush1.msra.mxu0 0.0
  %482 = vmatprep.subr.mxu0 0.0
  %483 = vmatpush1.msra.mxu0 0.0
  %484 = vmatprep.subr.mxu0 0.0
  %485 = vmatpush1.msra.mxu0 0.0
  %486 = vmatprep.subr.mxu0 0.0
  %487 = vmatpush1.msra.mxu0 0.0
  %488 = vmatprep.subr.mxu0 0.0
  %489 = vmatpush1.msra.mxu0 0.0
  %490 = vmatprep.subr.mxu0 0.0
  %491 = vmatpush1.msra.mxu0 0.0
  %492 = vmatprep.subr.mxu0 0.0
  %493 = vmatpush1.msra.mxu0 0.0
  %494 = vmatprep.subr.mxu0 0.0
  %495 = vmatpush1.msra.mxu0 0.0
  %496 = vmatprep.subr.mxu0 0.0
  %497 = vmatpush1.msra.mxu0 0.0
  %498 = vmatprep.subr.mxu0 0.0
  %499 = vmatpush1.msra.mxu0 0.0
  %500 = vmatprep.subr.mxu0 0.0
  %501 = vmatpush1.msra.mxu0 0.0
  %502 = vmatprep.mubr.f32.mxu0 0.0
  %503 = vmatmul.mubr.f32.gmra.mrb[0].mxu0 %v367
  %v504 = vpop.f32.mrb[0].mxu0
  %v505 = vadd.f32 %v435, %v504
  %v506 = vpop.f32.mrb[0].mxu0
  %507 = vdwg.mxu0
  %v509 = vlaneseq
  %v510 = vshrl.u32 %v509, 7
  %v511 = vsub.s32 0, %v510
  %v512 = vrot.slane %v290, %v511
  %v514 = vadd.f32 %v505, %v512
  %v515 = vmax.f32 %v514, 0.0
  %v516 = vld [vmem:[#allocation2 + $0x1] sm:$0x1]
  %517 = vmatprep.subr.mxu0 0.0
  %518 = vmatpush1.msra.mxu0 %v242
  %519 = vmatprep.subr.mxu0 0.0
  %520 = vmatpush1.msra.mxu0 %v243
  %521 = vmatprep.subr.mxu0 0.0
  %522 = vmatpush1.msra.mxu0 %v244
  %523 = vmatprep.subr.mxu0 0.0
  %524 = vmatpush1.msra.mxu0 %v245
  %525 = vmatprep.subr.mxu0 0.0
  %526 = vmatpush1.msra.mxu0 %v246
  %527 = vmatprep.subr.mxu0 0.0
  %528 = vmatpush1.msra.mxu0 %v247
  %529 = vmatprep.subr.mxu0 0.0
  %530 = vmatpush1.msra.mxu0 %v248
  %531 = vmatprep.subr.mxu0 0.0
  %532 = vmatpush1.msra.mxu0 %v249
  %533 = vmatprep.subr.mxu0 0.0
  %534 = vmatpush1.msra.mxu0 %v250
  %535 = vmatprep.subr.mxu0 0.0
  %536 = vmatpush1.msra.mxu0 %v251
  %537 = vmatprep.subr.mxu0 0.0
  %538 = vmatpush1.msra.mxu0 %v252
  %539 = vmatprep.subr.mxu0 0.0
  %540 = vmatpush1.msra.mxu0 %v253
  %541 = vmatprep.subr.mxu0 0.0
  %542 = vmatpush1.msra.mxu0 %v254
  %543 = vmatprep.subr.mxu0 0.0
  %544 = vmatpush1.msra.mxu0 %v255
  %545 = vmatprep.subr.mxu0 0.0
  %546 = vmatpush1.msra.mxu0 %v256
  %547 = vmatprep.subr.mxu0 0.0
  %548 = vmatpush1.msra.mxu0 %v257
  %549 = vmatprep.subr.mxu0 0.0
  %550 = vmatpush1.msra.mxu0 0.0
  %551 = vmatprep.subr.mxu0 0.0
  %552 = vmatpush1.msra.mxu0 0.0
  %553 = vmatprep.subr.mxu0 0.0
  %554 = vmatpush1.msra.mxu0 0.0
  %555 = vmatprep.subr.mxu0 0.0
  %556 = vmatpush1.msra.mxu0 0.0
  %557 = vmatprep.subr.mxu0 0.0
  %558 = vmatpush1.msra.mxu0 0.0
  %559 = vmatprep.subr.mxu0 0.0
  %560 = vmatpush1.msra.mxu0 0.0
  %561 = vmatprep.subr.mxu0 0.0
  %562 = vmatpush1.msra.mxu0 0.0
  %563 = vmatprep.subr.mxu0 0.0
  %564 = vmatpush1.msra.mxu0 0.0
  %565 = vmatprep.subr.mxu0 0.0
  %566 = vmatpush1.msra.mxu0 0.0
  %567 = vmatprep.subr.mxu0 0.0
  %568 = vmatpush1.msra.mxu0 0.0
  %569 = vmatprep.subr.mxu0 0.0
  %570 = vmatpush1.msra.mxu0 0.0
  %571 = vmatprep.subr.mxu0 0.0
  %572 = vmatpush1.msra.mxu0 0.0
  %573 = vmatprep.subr.mxu0 0.0
  %574 = vmatpush1.msra.mxu0 0.0
  %575 = vmatprep.subr.mxu0 0.0
  %576 = vmatpush1.msra.mxu0 0.0
  %577 = vmatprep.subr.mxu0 0.0
  %578 = vmatpush1.msra.mxu0 0.0
  %579 = vmatprep.subr.mxu0 0.0
  %580 = vmatpush1.msra.mxu0 0.0
  %581 = vmatprep.mubr.f32.mxu0 0.0
  %582 = vmatmul.mubr.f32.gmra.mrb[0].mxu0 %v367
  %v583 = vpop.f32.mrb[0].mxu0
  %v584 = vadd.f32 0.0, %v583
  %v585 = vpop.f32.mrb[0].mxu0
  %586 = vdwg.mxu0
  %v587 = vlaneseq
  %v588 = vshrl.u32 %v587, 7
  %v589 = vsub.s32 0, %v588
  %v590 = vrot.slane %v516, %v589
  %v591 = vadd.f32 %v590, %v584
  %v592 = vmax.f32 %v591, 0.0
  %593 = vmatprep.subr.mxu0 0.0
  %594 = vmatpush1.msra.mxu0 %v274
  %595 = vmatprep.subr.mxu0 0.0
  %596 = vmatpush1.msra.mxu0 %v275
  %597 = vmatprep.subr.mxu0 0.0
  %598 = vmatpush1.msra.mxu0 %v276
  %599 = vmatprep.subr.mxu0 0.0
  %600 = vmatpush1.msra.mxu0 %v277
  %601 = vmatprep.subr.mxu0 0.0
  %602 = vmatpush1.msra.mxu0 %v278
  %603 = vmatprep.subr.mxu0 0.0
  %604 = vmatpush1.msra.mxu0 %v279
  %605 = vmatprep.subr.mxu0 0.0
  %606 = vmatpush1.msra.mxu0 %v280
  %607 = vmatprep.subr.mxu0 0.0
  %608 = vmatpush1.msra.mxu0 %v281
  %609 = vmatprep.subr.mxu0 0.0
  %610 = vmatpush1.msra.mxu0 %v282
  %611 = vmatprep.subr.mxu0 0.0
  %612 = vmatpush1.msra.mxu0 %v283
  %613 = vmatprep.subr.mxu0 0.0
  %614 = vmatpush1.msra.mxu0 %v284
  %615 = vmatprep.subr.mxu0 0.0
  %616 = vmatpush1.msra.mxu0 %v285
  %617 = vmatprep.subr.mxu0 0.0
  %618 = vmatpush1.msra.mxu0 %v286
  %619 = vmatprep.subr.mxu0 0.0
  %620 = vmatpush1.msra.mxu0 %v287
  %621 = vmatprep.subr.mxu0 0.0
  %622 = vmatpush1.msra.mxu0 %v288
  %623 = vmatprep.subr.mxu0 0.0
  %624 = vmatpush1.msra.mxu0 %v289
  %625 = vmatprep.subr.mxu0 0.0
  %626 = vmatpush1.msra.mxu0 0.0
  %627 = vmatprep.subr.mxu0 0.0
  %628 = vmatpush1.msra.mxu0 0.0
  %629 = vmatprep.subr.mxu0 0.0
  %630 = vmatpush1.msra.mxu0 0.0
  %631 = vmatprep.subr.mxu0 0.0
  %632 = vmatpush1.msra.mxu0 0.0
  %633 = vmatprep.subr.mxu0 0.0
  %634 = vmatpush1.msra.mxu0 0.0
  %635 = vmatprep.subr.mxu0 0.0
  %636 = vmatpush1.msra.mxu0 0.0
  %637 = vmatprep.subr.mxu0 0.0
  %638 = vmatpush1.msra.mxu0 0.0
  %639 = vmatprep.subr.mxu0 0.0
  %640 = vmatpush1.msra.mxu0 0.0
  %641 = vmatprep.subr.mxu0 0.0
  %642 = vmatpush1.msra.mxu0 0.0
  %643 = vmatprep.subr.mxu0 0.0
  %644 = vmatpush1.msra.mxu0 0.0
  %645 = vmatprep.subr.mxu0 0.0
  %646 = vmatpush1.msra.mxu0 0.0
  %647 = vmatprep.subr.mxu0 0.0
  %648 = vmatpush1.msra.mxu0 0.0
  %649 = vmatprep.subr.mxu0 0.0
  %650 = vmatpush1.msra.mxu0 0.0
  %651 = vmatprep.subr.mxu0 0.0
  %652 = vmatpush1.msra.mxu0 0.0
  %653 = vmatprep.subr.mxu0 0.0
  %654 = vmatpush1.msra.mxu0 0.0
  %655 = vmatprep.subr.mxu0 0.0
  %656 = vmatpush1.msra.mxu0 0.0
  %657 = vmatprep.mubr.f32.mxu0 0.0
  %658 = vmatmul.mubr.f32.gmra.mrb[0].mxu0 %v515
  %v659 = vpop.f32.mrb[0].mxu0
  %v660 = vadd.f32 0.0, %v659
  %v661 = vpop.f32.mrb[0].mxu0
  %662 = vdwg.mxu0
  %663 = vmatprep.subr.mxu0 0.0
  %664 = vmatpush1.msra.mxu0 %v258
  %665 = vmatprep.subr.mxu0 0.0
  %666 = vmatpush1.msra.mxu0 %v259
  %667 = vmatprep.subr.mxu0 0.0
  %668 = vmatpush1.msra.mxu0 %v260
  %669 = vmatprep.subr.mxu0 0.0
  %670 = vmatpush1.msra.mxu0 %v261
  %671 = vmatprep.subr.mxu0 0.0
  %672 = vmatpush1.msra.mxu0 %v262
  %673 = vmatprep.subr.mxu0 0.0
  %674 = vmatpush1.msra.mxu0 %v263
  %675 = vmatprep.subr.mxu0 0.0
  %676 = vmatpush1.msra.mxu0 %v264
  %677 = vmatprep.subr.mxu0 0.0
  %678 = vmatpush1.msra.mxu0 %v265
  %679 = vmatprep.subr.mxu0 0.0
  %680 = vmatpush1.msra.mxu0 %v266
  %681 = vmatprep.subr.mxu0 0.0
  %682 = vmatpush1.msra.mxu0 %v267
  %683 = vmatprep.subr.mxu0 0.0
  %684 = vmatpush1.msra.mxu0 %v268
  %685 = vmatprep.subr.mxu0 0.0
  %686 = vmatpush1.msra.mxu0 %v269
  %687 = vmatprep.subr.mxu0 0.0
  %688 = vmatpush1.msra.mxu0 %v270
  %689 = vmatprep.subr.mxu0 0.0
  %690 = vmatpush1.msra.mxu0 %v271
  %691 = vmatprep.subr.mxu0 0.0
  %692 = vmatpush1.msra.mxu0 %v272
  %693 = vmatprep.subr.mxu0 0.0
  %694 = vmatpush1.msra.mxu0 %v273
  %695 = vmatprep.subr.mxu0 0.0
  %696 = vmatpush1.msra.mxu0 0.0
  %697 = vmatprep.subr.mxu0 0.0
  %698 = vmatpush1.msra.mxu0 0.0
  %699 = vmatprep.subr.mxu0 0.0
  %700 = vmatpush1.msra.mxu0 0.0
  %701 = vmatprep.subr.mxu0 0.0
  %702 = vmatpush1.msra.mxu0 0.0
  %703 = vmatprep.subr.mxu0 0.0
  %704 = vmatpush1.msra.mxu0 0.0
  %705 = vmatprep.subr.mxu0 0.0
  %706 = vmatpush1.msra.mxu0 0.0
  %707 = vmatprep.subr.mxu0 0.0
  %708 = vmatpush1.msra.mxu0 0.0
  %709 = vmatprep.subr.mxu0 0.0
  %710 = vmatpush1.msra.mxu0 0.0
  %711 = vmatprep.subr.mxu0 0.0
  %712 = vmatpush1.msra.mxu0 0.0
  %713 = vmatprep.subr.mxu0 0.0
  %714 = vmatpush1.msra.mxu0 0.0
  %715 = vmatprep.subr.mxu0 0.0
  %716 = vmatpush1.msra.mxu0 0.0
  %717 = vmatprep.subr.mxu0 0.0
  %718 = vmatpush1.msra.mxu0 0.0
  %719 = vmatprep.subr.mxu0 0.0
  %720 = vmatpush1.msra.mxu0 0.0
  %721 = vmatprep.subr.mxu0 0.0
  %722 = vmatpush1.msra.mxu0 0.0
  %723 = vmatprep.subr.mxu0 0.0
  %724 = vmatpush1.msra.mxu0 0.0
  %725 = vmatprep.subr.mxu0 0.0
  %726 = vmatpush1.msra.mxu0 0.0
  %727 = vmatprep.mubr.f32.mxu0 0.0
  %728 = vmatmul.mubr.f32.gmra.mrb[0].mxu0 %v592
  %v729 = vpop.f32.mrb[0].mxu0
  %v730 = vadd.f32 %v660, %v729
  %v731 = vpop.f32.mrb[0].mxu0
  %732 = vdwg.mxu0
  %v733 = vadd.f32 %v730, %v512
  %v734 = vmax.f32 %v733, 0.0
  %v735 = vld [vmem:[#allocation2 + $0x2] sm:$0x1]
  %736 = vmatprep.subr.mxu0 0.0
  %737 = vmatpush1.msra.mxu0 %v242
  %738 = vmatprep.subr.mxu0 0.0
  %739 = vmatpush1.msra.mxu0 %v243
  %740 = vmatprep.subr.mxu0 0.0
  %741 = vmatpush1.msra.mxu0 %v244
  %742 = vmatprep.subr.mxu0 0.0
  %743 = vmatpush1.msra.mxu0 %v245
  %744 = vmatprep.subr.mxu0 0.0
  %745 = vmatpush1.msra.mxu0 %v246
  %746 = vmatprep.subr.mxu0 0.0
  %747 = vmatpush1.msra.mxu0 %v247
  %748 = vmatprep.subr.mxu0 0.0
  %749 = vmatpush1.msra.mxu0 %v248
  %750 = vmatprep.subr.mxu0 0.0
  %751 = vmatpush1.msra.mxu0 %v249
  %752 = vmatprep.subr.mxu0 0.0
  %753 = vmatpush1.msra.mxu0 %v250
  %754 = vmatprep.subr.mxu0 0.0
  %755 = vmatpush1.msra.mxu0 %v251
  %756 = vmatprep.subr.mxu0 0.0
  %757 = vmatpush1.msra.mxu0 %v252
  %758 = vmatprep.subr.mxu0 0.0
  %759 = vmatpush1.msra.mxu0 %v253
  %760 = vmatprep.subr.mxu0 0.0
  %761 = vmatpush1.msra.mxu0 %v254
  %762 = vmatprep.subr.mxu0 0.0
  %763 = vmatpush1.msra.mxu0 %v255
  %764 = vmatprep.subr.mxu0 0.0
  %765 = vmatpush1.msra.mxu0 %v256
  %766 = vmatprep.subr.mxu0 0.0
  %767 = vmatpush1.msra.mxu0 %v257
  %768 = vmatprep.subr.mxu0 0.0
  %769 = vmatpush1.msra.mxu0 0.0
  %770 = vmatprep.subr.mxu0 0.0
  %771 = vmatpush1.msra.mxu0 0.0
  %772 = vmatprep.subr.mxu0 0.0
  %773 = vmatpush1.msra.mxu0 0.0
  %774 = vmatprep.subr.mxu0 0.0
  %775 = vmatpush1.msra.mxu0 0.0
  %776 = vmatprep.subr.mxu0 0.0
  %777 = vmatpush1.msra.mxu0 0.0
  %778 = vmatprep.subr.mxu0 0.0
  %779 = vmatpush1.msra.mxu0 0.0
  %780 = vmatprep.subr.mxu0 0.0
  %781 = vmatpush1.msra.mxu0 0.0
  %782 = vmatprep.subr.mxu0 0.0
  %783 = vmatpush1.msra.mxu0 0.0
  %784 = vmatprep.subr.mxu0 0.0
  %785 = vmatpush1.msra.mxu0 0.0
  %786 = vmatprep.subr.mxu0 0.0
  %787 = vmatpush1.msra.mxu0 0.0
  %788 = vmatprep.subr.mxu0 0.0
  %789 = vmatpush1.msra.mxu0 0.0
  %790 = vmatprep.subr.mxu0 0.0
  %791 = vmatpush1.msra.mxu0 0.0
  %792 = vmatprep.subr.mxu0 0.0
  %793 = vmatpush1.msra.mxu0 0.0
  %794 = vmatprep.subr.mxu0 0.0
  %795 = vmatpush1.msra.mxu0 0.0
  %796 = vmatprep.subr.mxu0 0.0
  %797 = vmatpush1.msra.mxu0 0.0
  %798 = vmatprep.subr.mxu0 0.0
  %799 = vmatpush1.msra.mxu0 0.0
  %800 = vmatprep.mubr.f32.mxu0 0.0
  %801 = vmatmul.mubr.f32.gmra.mrb[0].mxu0 %v592
  %v802 = vpop.f32.mrb[0].mxu0
  %v803 = vadd.f32 0.0, %v802
  %v804 = vpop.f32.mrb[0].mxu0
  %805 = vdwg.mxu0
  %v806 = vlaneseq
  %v807 = vshrl.u32 %v806, 7
  %v808 = vsub.s32 0, %v807
  %v809 = vrot.slane %v735, %v808
  %v810 = vadd.f32 %v809, %v803
  %v811 = vmax.f32 %v810, 0.0
  %812 = vmatprep.subr.mxu0 0.0
  %813 = vmatpush1.msra.mxu0 %v274
  %814 = vmatprep.subr.mxu0 0.0
  %815 = vmatpush1.msra.mxu0 %v275
  %816 = vmatprep.subr.mxu0 0.0
  %817 = vmatpush1.msra.mxu0 %v276
  %818 = vmatprep.subr.mxu0 0.0
  %819 = vmatpush1.msra.mxu0 %v277
  %820 = vmatprep.subr.mxu0 0.0
  %821 = vmatpush1.msra.mxu0 %v278
  %822 = vmatprep.subr.mxu0 0.0
  %823 = vmatpush1.msra.mxu0 %v279
  %824 = vmatprep.subr.mxu0 0.0
  %825 = vmatpush1.msra.mxu0 %v280
  %826 = vmatprep.subr.mxu0 0.0
  %827 = vmatpush1.msra.mxu0 %v281
  %828 = vmatprep.subr.mxu0 0.0
  %829 = vmatpush1.msra.mxu0 %v282
  %830 = vmatprep.subr.mxu0 0.0
  %831 = vmatpush1.msra.mxu0 %v283
  %832 = vmatprep.subr.mxu0 0.0
  %833 = vmatpush1.msra.mxu0 %v284
  %834 = vmatprep.subr.mxu0 0.0
  %835 = vmatpush1.msra.mxu0 %v285
  %836 = vmatprep.subr.mxu0 0.0
  %837 = vmatpush1.msra.mxu0 %v286
  %838 = vmatprep.subr.mxu0 0.0
  %839 = vmatpush1.msra.mxu0 %v287
  %840 = vmatprep.subr.mxu0 0.0
  %841 = vmatpush1.msra.mxu0 %v288
  %842 = vmatprep.subr.mxu0 0.0
  %843 = vmatpush1.msra.mxu0 %v289
  %844 = vmatprep.subr.mxu0 0.0
  %845 = vmatpush1.msra.mxu0 0.0
  %846 = vmatprep.subr.mxu0 0.0
  %847 = vmatpush1.msra.mxu0 0.0
  %848 = vmatprep.subr.mxu0 0.0
  %849 = vmatpush1.msra.mxu0 0.0
  %850 = vmatprep.subr.mxu0 0.0
  %851 = vmatpush1.msra.mxu0 0.0
  %852 = vmatprep.subr.mxu0 0.0
  %853 = vmatpush1.msra.mxu0 0.0
  %854 = vmatprep.subr.mxu0 0.0
  %855 = vmatpush1.msra.mxu0 0.0
  %856 = vmatprep.subr.mxu0 0.0
  %857 = vmatpush1.msra.mxu0 0.0
  %858 = vmatprep.subr.mxu0 0.0
  %859 = vmatpush1.msra.mxu0 0.0
  %860 = vmatprep.subr.mxu0 0.0
  %861 = vmatpush1.msra.mxu0 0.0
  %862 = vmatprep.subr.mxu0 0.0
  %863 = vmatpush1.msra.mxu0 0.0
  %864 = vmatprep.subr.mxu0 0.0
  %865 = vmatpush1.msra.mxu0 0.0
  %866 = vmatprep.subr.mxu0 0.0
  %867 = vmatpush1.msra.mxu0 0.0
  %868 = vmatprep.subr.mxu0 0.0
  %869 = vmatpush1.msra.mxu0 0.0
  %870 = vmatprep.subr.mxu0 0.0
  %871 = vmatpush1.msra.mxu0 0.0
  %872 = vmatprep.subr.mxu0 0.0
  %873 = vmatpush1.msra.mxu0 0.0
  %874 = vmatprep.subr.mxu0 0.0
  %875 = vmatpush1.msra.mxu0 0.0
  %876 = vmatprep.mubr.f32.mxu0 0.0
  %877 = vmatmul.mubr.f32.gmra.mrb[0].mxu0 %v734
  %v878 = vpop.f32.mrb[0].mxu0
  %v879 = vadd.f32 0.0, %v878
  %v880 = vpop.f32.mrb[0].mxu0
  %881 = vdwg.mxu0
  %882 = vmatprep.subr.mxu0 0.0
  %883 = vmatpush1.msra.mxu0 %v258
  %884 = vmatprep.subr.mxu0 0.0
  %885 = vmatpush1.msra.mxu0 %v259
  %886 = vmatprep.subr.mxu0 0.0
  %887 = vmatpush1.msra.mxu0 %v260
  %888 = vmatprep.subr.mxu0 0.0
  %889 = vmatpush1.msra.mxu0 %v261
  %890 = vmatprep.subr.mxu0 0.0
  %891 = vmatpush1.msra.mxu0 %v262
  %892 = vmatprep.subr.mxu0 0.0
  %893 = vmatpush1.msra.mxu0 %v263
  %894 = vmatprep.subr.mxu0 0.0
  %895 = vmatpush1.msra.mxu0 %v264
  %896 = vmatprep.subr.mxu0 0.0
  %897 = vmatpush1.msra.mxu0 %v265
  %898 = vmatprep.subr.mxu0 0.0
  %899 = vmatpush1.msra.mxu0 %v266
  %900 = vmatprep.subr.mxu0 0.0
  %901 = vmatpush1.msra.mxu0 %v267
  %902 = vmatprep.subr.mxu0 0.0
  %903 = vmatpush1.msra.mxu0 %v268
  %904 = vmatprep.subr.mxu0 0.0
  %905 = vmatpush1.msra.mxu0 %v269
  %906 = vmatprep.subr.mxu0 0.0
  %907 = vmatpush1.msra.mxu0 %v270
  %908 = vmatprep.subr.mxu0 0.0
  %909 = vmatpush1.msra.mxu0 %v271
  %910 = vmatprep.subr.mxu0 0.0
  %911 = vmatpush1.msra.mxu0 %v272
  %912 = vmatprep.subr.mxu0 0.0
  %913 = vmatpush1.msra.mxu0 %v273
  %914 = vmatprep.subr.mxu0 0.0
  %915 = vmatpush1.msra.mxu0 0.0
  %916 = vmatprep.subr.mxu0 0.0
  %917 = vmatpush1.msra.mxu0 0.0
  %918 = vmatprep.subr.mxu0 0.0
  %919 = vmatpush1.msra.mxu0 0.0
  %920 = vmatprep.subr.mxu0 0.0
  %921 = vmatpush1.msra.mxu0 0.0
  %922 = vmatprep.subr.mxu0 0.0
  %923 = vmatpush1.msra.mxu0 0.0
  %924 = vmatprep.subr.mxu0 0.0
  %925 = vmatpush1.msra.mxu0 0.0
  %926 = vmatprep.subr.mxu0 0.0
  %927 = vmatpush1.msra.mxu0 0.0
  %928 = vmatprep.subr.mxu0 0.0
  %929 = vmatpush1.msra.mxu0 0.0
  %930 = vmatprep.subr.mxu0 0.0
  %931 = vmatpush1.msra.mxu0 0.0
  %932 = vmatprep.subr.mxu0 0.0
  %933 = vmatpush1.msra.mxu0 0.0
  %934 = vmatprep.subr.mxu0 0.0
  %935 = vmatpush1.msra.mxu0 0.0
  %936 = vmatprep.subr.mxu0 0.0
  %937 = vmatpush1.msra.mxu0 0.0
  %938 = vmatprep.subr.mxu0 0.0
  %939 = vmatpush1.msra.mxu0 0.0
  %940 = vmatprep.subr.mxu0 0.0
  %941 = vmatpush1.msra.mxu0 0.0
  %942 = vmatprep.subr.mxu0 0.0
  %943 = vmatpush1.msra.mxu0 0.0
  %944 = vmatprep.subr.mxu0 0.0
  %945 = vmatpush1.msra.mxu0 0.0
  %946 = vmatprep.mubr.f32.mxu0 0.0
  %947 = vmatmul.mubr.f32.gmra.mrb[0].mxu0 %v811
  %v948 = vpop.f32.mrb[0].mxu0
  %v949 = vadd.f32 %v879, %v948
  %v950 = vpop.f32.mrb[0].mxu0
  %951 = vdwg.mxu0
  %v952 = vadd.f32 %v949, %v512
  %v953 = vmax.f32 %v952, 0.0
  %v954 = vld [vmem:[#allocation2 + $0x3] sm:$0x1]
  %955 = vmatprep.subr.mxu0 0.0
  %956 = vmatpush1.msra.mxu0 %v242
  %957 = vmatprep.subr.mxu0 0.0
  %958 = vmatpush1.msra.mxu0 %v243
  %959 = vmatprep.subr.mxu0 0.0
  %960 = vmatpush1.msra.mxu0 %v244
  %961 = vmatprep.subr.mxu0 0.0
  %962 = vmatpush1.msra.mxu0 %v245
  %963 = vmatprep.subr.mxu0 0.0
  %964 = vmatpush1.msra.mxu0 %v246
  %965 = vmatprep.subr.mxu0 0.0
  %966 = vmatpush1.msra.mxu0 %v247
  %967 = vmatprep.subr.mxu0 0.0
  %968 = vmatpush1.msra.mxu0 %v248
  %969 = vmatprep.subr.mxu0 0.0
  %970 = vmatpush1.msra.mxu0 %v249
  %971 = vmatprep.subr.mxu0 0.0
  %972 = vmatpush1.msra.mxu0 %v250
  %973 = vmatprep.subr.mxu0 0.0
  %974 = vmatpush1.msra.mxu0 %v251
  %975 = vmatprep.subr.mxu0 0.0
  %976 = vmatpush1.msra.mxu0 %v252
  %977 = vmatprep.subr.mxu0 0.0
  %978 = vmatpush1.msra.mxu0 %v253
  %979 = vmatprep.subr.mxu0 0.0
  %980 = vmatpush1.msra.mxu0 %v254
  %981 = vmatprep.subr.mxu0 0.0
  %982 = vmatpush1.msra.mxu0 %v255
  %983 = vmatprep.subr.mxu0 0.0
  %984 = vmatpush1.msra.mxu0 %v256
  %985 = vmatprep.subr.mxu0 0.0
  %986 = vmatpush1.msra.mxu0 %v257
  %987 = vmatprep.subr.mxu0 0.0
  %988 = vmatpush1.msra.mxu0 0.0
  %989 = vmatprep.subr.mxu0 0.0
  %990 = vmatpush1.msra.mxu0 0.0
  %991 = vmatprep.subr.mxu0 0.0
  %992 = vmatpush1.msra.mxu0 0.0
  %993 = vmatprep.subr.mxu0 0.0
  %994 = vmatpush1.msra.mxu0 0.0
  %995 = vmatprep.subr.mxu0 0.0
  %996 = vmatpush1.msra.mxu0 0.0
  %997 = vmatprep.subr.mxu0 0.0
  %998 = vmatpush1.msra.mxu0 0.0
  %999 = vmatprep.subr.mxu0 0.0
  %1000 = vmatpush1.msra.mxu0 0.0
  %1001 = vmatprep.subr.mxu0 0.0
  %1002 = vmatpush1.msra.mxu0 0.0
  %1003 = vmatprep.subr.mxu0 0.0
  %1004 = vmatpush1.msra.mxu0 0.0
  %1005 = vmatprep.subr.mxu0 0.0
  %1006 = vmatpush1.msra.mxu0 0.0
  %1007 = vmatprep.subr.mxu0 0.0
  %1008 = vmatpush1.msra.mxu0 0.0
  %1009 = vmatprep.subr.mxu0 0.0
  %1010 = vmatpush1.msra.mxu0 0.0
  %1011 = vmatprep.subr.mxu0 0.0
  %1012 = vmatpush1.msra.mxu0 0.0
  %1013 = vmatprep.subr.mxu0 0.0
  %1014 = vmatpush1.msra.mxu0 0.0
  %1015 = vmatprep.subr.mxu0 0.0
  %1016 = vmatpush1.msra.mxu0 0.0
  %1017 = vmatprep.subr.mxu0 0.0
  %1018 = vmatpush1.msra.mxu0 0.0
  %1019 = vmatprep.mubr.f32.mxu0 0.0
  %1020 = vmatmul.mubr.f32.gmra.mrb[0].mxu0 %v811
  %v1021 = vpop.f32.mrb[0].mxu0
  %v1022 = vadd.f32 0.0, %v1021
  %v1023 = vpop.f32.mrb[0].mxu0
  %1024 = vdwg.mxu0
  %v1025 = vlaneseq
  %v1026 = vshrl.u32 %v1025, 7
  %v1027 = vsub.s32 0, %v1026
  %v1028 = vrot.slane %v954, %v1027
  %v1029 = vadd.f32 %v1028, %v1022
  %v1030 = vmax.f32 %v1029, 0.0
  %1031 = vmatprep.subr.mxu0 0.0
  %1032 = vmatpush1.msra.mxu0 %v274
  %1033 = vmatprep.subr.mxu0 0.0
  %1034 = vmatpush1.msra.mxu0 %v275
  %1035 = vmatprep.subr.mxu0 0.0
  %1036 = vmatpush1.msra.mxu0 %v276
  %1037 = vmatprep.subr.mxu0 0.0
  %1038 = vmatpush1.msra.mxu0 %v277
  %1039 = vmatprep.subr.mxu0 0.0
  %1040 = vmatpush1.msra.mxu0 %v278
  %1041 = vmatprep.subr.mxu0 0.0
  %1042 = vmatpush1.msra.mxu0 %v279
  %1043 = vmatprep.subr.mxu0 0.0
  %1044 = vmatpush1.msra.mxu0 %v280
  %1045 = vmatprep.subr.mxu0 0.0
  %1046 = vmatpush1.msra.mxu0 %v281
  %1047 = vmatprep.subr.mxu0 0.0
  %1048 = vmatpush1.msra.mxu0 %v282
  %1049 = vmatprep.subr.mxu0 0.0
  %1050 = vmatpush1.msra.mxu0 %v283
  %1051 = vmatprep.subr.mxu0 0.0
  %1052 = vmatpush1.msra.mxu0 %v284
  %1053 = vmatprep.subr.mxu0 0.0
  %1054 = vmatpush1.msra.mxu0 %v285
  %1055 = vmatprep.subr.mxu0 0.0
  %1056 = vmatpush1.msra.mxu0 %v286
  %1057 = vmatprep.subr.mxu0 0.0
  %1058 = vmatpush1.msra.mxu0 %v287
  %1059 = vmatprep.subr.mxu0 0.0
  %1060 = vmatpush1.msra.mxu0 %v288
  %1061 = vmatprep.subr.mxu0 0.0
  %1062 = vmatpush1.msra.mxu0 %v289
  %1063 = vmatprep.subr.mxu0 0.0
  %1064 = vmatpush1.msra.mxu0 0.0
  %1065 = vmatprep.subr.mxu0 0.0
  %1066 = vmatpush1.msra.mxu0 0.0
  %1067 = vmatprep.subr.mxu0 0.0
  %1068 = vmatpush1.msra.mxu0 0.0
  %1069 = vmatprep.subr.mxu0 0.0
  %1070 = vmatpush1.msra.mxu0 0.0
  %1071 = vmatprep.subr.mxu0 0.0
  %1072 = vmatpush1.msra.mxu0 0.0
  %1073 = vmatprep.subr.mxu0 0.0
  %1074 = vmatpush1.msra.mxu0 0.0
  %1075 = vmatprep.subr.mxu0 0.0
  %1076 = vmatpush1.msra.mxu0 0.0
  %1077 = vmatprep.subr.mxu0 0.0
  %1078 = vmatpush1.msra.mxu0 0.0
  %1079 = vmatprep.subr.mxu0 0.0
  %1080 = vmatpush1.msra.mxu0 0.0
  %1081 = vmatprep.subr.mxu0 0.0
  %1082 = vmatpush1.msra.mxu0 0.0
  %1083 = vmatprep.subr.mxu0 0.0
  %1084 = vmatpush1.msra.mxu0 0.0
  %1085 = vmatprep.subr.mxu0 0.0
  %1086 = vmatpush1.msra.mxu0 0.0
  %1087 = vmatprep.subr.mxu0 0.0
  %1088 = vmatpush1.msra.mxu0 0.0
  %1089 = vmatprep.subr.mxu0 0.0
  %1090 = vmatpush1.msra.mxu0 0.0
  %1091 = vmatprep.subr.mxu0 0.0
  %1092 = vmatpush1.msra.mxu0 0.0
  %1093 = vmatprep.subr.mxu0 0.0
  %1094 = vmatpush1.msra.mxu0 0.0
  %1095 = vmatprep.mubr.f32.mxu0 0.0
  %1096 = vmatmul.mubr.f32.gmra.mrb[0].mxu0 %v953
  %v1097 = vpop.f32.mrb[0].mxu0
  %v1098 = vadd.f32 0.0, %v1097
  %v1099 = vpop.f32.mrb[0].mxu0
  %1100 = vdwg.mxu0
  %1101 = vmatprep.subr.mxu0 0.0
  %1102 = vmatpush1.msra.mxu0 %v258
  %1103 = vmatprep.subr.mxu0 0.0
  %1104 = vmatpush1.msra.mxu0 %v259
  %1105 = vmatprep.subr.mxu0 0.0
  %1106 = vmatpush1.msra.mxu0 %v260
  %1107 = vmatprep.subr.mxu0 0.0
  %1108 = vmatpush1.msra.mxu0 %v261
  %1109 = vmatprep.subr.mxu0 0.0
  %1110 = vmatpush1.msra.mxu0 %v262
  %1111 = vmatprep.subr.mxu0 0.0
  %1112 = vmatpush1.msra.mxu0 %v263
  %1113 = vmatprep.subr.mxu0 0.0
  %1114 = vmatpush1.msra.mxu0 %v264
  %1115 = vmatprep.subr.mxu0 0.0
  %1116 = vmatpush1.msra.mxu0 %v265
  %1117 = vmatprep.subr.mxu0 0.0
  %1118 = vmatpush1.msra.mxu0 %v266
  %1119 = vmatprep.subr.mxu0 0.0
  %1120 = vmatpush1.msra.mxu0 %v267
  %1121 = vmatprep.subr.mxu0 0.0
  %1122 = vmatpush1.msra.mxu0 %v268
  %1123 = vmatprep.subr.mxu0 0.0
  %1124 = vmatpush1.msra.mxu0 %v269
  %1125 = vmatprep.subr.mxu0 0.0
  %1126 = vmatpush1.msra.mxu0 %v270
  %1127 = vmatprep.subr.mxu0 0.0
  %1128 = vmatpush1.msra.mxu0 %v271
  %1129 = vmatprep.subr.mxu0 0.0
  %1130 = vmatpush1.msra.mxu0 %v272
  %1131 = vmatprep.subr.mxu0 0.0
  %1132 = vmatpush1.msra.mxu0 %v273
  %1133 = vmatprep.subr.mxu0 0.0
  %1134 = vmatpush1.msra.mxu0 0.0
  %1135 = vmatprep.subr.mxu0 0.0
  %1136 = vmatpush1.msra.mxu0 0.0
  %1137 = vmatprep.subr.mxu0 0.0
  %1138 = vmatpush1.msra.mxu0 0.0
  %1139 = vmatprep.subr.mxu0 0.0
  %1140 = vmatpush1.msra.mxu0 0.0
  %1141 = vmatprep.subr.mxu0 0.0
  %1142 = vmatpush1.msra.mxu0 0.0
  %1143 = vmatprep.subr.mxu0 0.0
  %1144 = vmatpush1.msra.mxu0 0.0
  %1145 = vmatprep.subr.mxu0 0.0
  %1146 = vmatpush1.msra.mxu0 0.0
  %1147 = vmatprep.subr.mxu0 0.0
  %1148 = vmatpush1.msra.mxu0 0.0
  %1149 = vmatprep.subr.mxu0 0.0
  %1150 = vmatpush1.msra.mxu0 0.0
  %1151 = vmatprep.subr.mxu0 0.0
  %1152 = vmatpush1.msra.mxu0 0.0
  %1153 = vmatprep.subr.mxu0 0.0
  %1154 = vmatpush1.msra.mxu0 0.0
  %1155 = vmatprep.subr.mxu0 0.0
  %1156 = vmatpush1.msra.mxu0 0.0
  %1157 = vmatprep.subr.mxu0 0.0
  %1158 = vmatpush1.msra.mxu0 0.0
  %1159 = vmatprep.subr.mxu0 0.0
  %1160 = vmatpush1.msra.mxu0 0.0
  %1161 = vmatprep.subr.mxu0 0.0
  %1162 = vmatpush1.msra.mxu0 0.0
  %1163 = vmatprep.subr.mxu0 0.0
  %1164 = vmatpush1.msra.mxu0 0.0
  %1165 = vmatprep.mubr.f32.mxu0 0.0
  %1166 = vmatmul.mubr.f32.gmra.mrb[0].mxu0 %v1030
  %v1167 = vpop.f32.mrb[0].mxu0
  %v1168 = vadd.f32 %v1098, %v1167
  %v1169 = vpop.f32.mrb[0].mxu0
  %1170 = vdwg.mxu0
  %v1171 = vadd.f32 %v1168, %v512
  %v1172 = vmax.f32 %v1171, 0.0
  %v1173 = vld [vmem:[#allocation2 + $0x4] sm:$0x1]
  %1174 = vmatprep.subr.mxu0 0.0
  %1175 = vmatpush1.msra.mxu0 %v242
  %1176 = vmatprep.subr.mxu0 0.0
  %1177 = vmatpush1.msra.mxu0 %v243
  %1178 = vmatprep.subr.mxu0 0.0
  %1179 = vmatpush1.msra.mxu0 %v244
  %1180 = vmatprep.subr.mxu0 0.0
  %1181 = vmatpush1.msra.mxu0 %v245
  %1182 = vmatprep.subr.mxu0 0.0
  %1183 = vmatpush1.msra.mxu0 %v246
  %1184 = vmatprep.subr.mxu0 0.0
  %1185 = vmatpush1.msra.mxu0 %v247
  %1186 = vmatprep.subr.mxu0 0.0
  %1187 = vmatpush1.msra.mxu0 %v248
  %1188 = vmatprep.subr.mxu0 0.0
  %1189 = vmatpush1.msra.mxu0 %v249
  %1190 = vmatprep.subr.mxu0 0.0
  %1191 = vmatpush1.msra.mxu0 %v250
  %1192 = vmatprep.subr.mxu0 0.0
  %1193 = vmatpush1.msra.mxu0 %v251
  %1194 = vmatprep.subr.mxu0 0.0
  %1195 = vmatpush1.msra.mxu0 %v252
  %1196 = vmatprep.subr.mxu0 0.0
  %1197 = vmatpush1.msra.mxu0 %v253
  %1198 = vmatprep.subr.mxu0 0.0
  %1199 = vmatpush1.msra.mxu0 %v254
  %1200 = vmatprep.subr.mxu0 0.0
  %1201 = vmatpush1.msra.mxu0 %v255
  %1202 = vmatprep.subr.mxu0 0.0
  %1203 = vmatpush1.msra.mxu0 %v256
  %1204 = vmatprep.subr.mxu0 0.0
  %1205 = vmatpush1.msra.mxu0 %v257
  %1206 = vmatprep.subr.mxu0 0.0
  %1207 = vmatpush1.msra.mxu0 0.0
  %1208 = vmatprep.subr.mxu0 0.0
  %1209 = vmatpush1.msra.mxu0 0.0
  %1210 = vmatprep.subr.mxu0 0.0
  %1211 = vmatpush1.msra.mxu0 0.0
  %1212 = vmatprep.subr.mxu0 0.0
  %1213 = vmatpush1.msra.mxu0 0.0
  %1214 = vmatprep.subr.mxu0 0.0
  %1215 = vmatpush1.msra.mxu0 0.0
  %1216 = vmatprep.subr.mxu0 0.0
  %1217 = vmatpush1.msra.mxu0 0.0
  %1218 = vmatprep.subr.mxu0 0.0
  %1219 = vmatpush1.msra.mxu0 0.0
  %1220 = vmatprep.subr.mxu0 0.0
  %1221 = vmatpush1.msra.mxu0 0.0
  %1222 = vmatprep.subr.mxu0 0.0
  %1223 = vmatpush1.msra.mxu0 0.0
  %1224 = vmatprep.subr.mxu0 0.0
  %1225 = vmatpush1.msra.mxu0 0.0
  %1226 = vmatprep.subr.mxu0 0.0
  %1227 = vmatpush1.msra.mxu0 0.0
  %1228 = vmatprep.subr.mxu0 0.0
  %1229 = vmatpush1.msra.mxu0 0.0
  %1230 = vmatprep.subr.mxu0 0.0
  %1231 = vmatpush1.msra.mxu0 0.0
  %1232 = vmatprep.subr.mxu0 0.0
  %1233 = vmatpush1.msra.mxu0 0.0
  %1234 = vmatprep.subr.mxu0 0.0
  %1235 = vmatpush1.msra.mxu0 0.0
  %1236 = vmatprep.subr.mxu0 0.0
  %1237 = vmatpush1.msra.mxu0 0.0
  %1238 = vmatprep.mubr.f32.mxu0 0.0
  %1239 = vmatmul.mubr.f32.gmra.mrb[0].mxu0 %v1030
  %v1240 = vpop.f32.mrb[0].mxu0
  %v1241 = vadd.f32 0.0, %v1240
  %v1242 = vpop.f32.mrb[0].mxu0
  %1243 = vdwg.mxu0
  %v1244 = vlaneseq
  %v1245 = vshrl.u32 %v1244, 7
  %v1246 = vsub.s32 0, %v1245
  %v1247 = vrot.slane %v1173, %v1246
  %v1248 = vadd.f32 %v1247, %v1241
  %v1249 = vmax.f32 %v1248, 0.0
  %1250 = vmatprep.subr.mxu0 0.0
  %1251 = vmatpush1.msra.mxu0 %v274
  %1252 = vmatprep.subr.mxu0 0.0
  %1253 = vmatpush1.msra.mxu0 %v275
  %1254 = vmatprep.subr.mxu0 0.0
  %1255 = vmatpush1.msra.mxu0 %v276
  %1256 = vmatprep.subr.mxu0 0.0
  %1257 = vmatpush1.msra.mxu0 %v277
  %1258 = vmatprep.subr.mxu0 0.0
  %1259 = vmatpush1.msra.mxu0 %v278
  %1260 = vmatprep.subr.mxu0 0.0
  %1261 = vmatpush1.msra.mxu0 %v279
  %1262 = vmatprep.subr.mxu0 0.0
  %1263 = vmatpush1.msra.mxu0 %v280
  %1264 = vmatprep.subr.mxu0 0.0
  %1265 = vmatpush1.msra.mxu0 %v281
  %1266 = vmatprep.subr.mxu0 0.0
  %1267 = vmatpush1.msra.mxu0 %v282
  %1268 = vmatprep.subr.mxu0 0.0
  %1269 = vmatpush1.msra.mxu0 %v283
  %1270 = vmatprep.subr.mxu0 0.0
  %1271 = vmatpush1.msra.mxu0 %v284
  %1272 = vmatprep.subr.mxu0 0.0
  %1273 = vmatpush1.msra.mxu0 %v285
  %1274 = vmatprep.subr.mxu0 0.0
  %1275 = vmatpush1.msra.mxu0 %v286
  %1276 = vmatprep.subr.mxu0 0.0
  %1277 = vmatpush1.msra.mxu0 %v287
  %1278 = vmatprep.subr.mxu0 0.0
  %1279 = vmatpush1.msra.mxu0 %v288
  %1280 = vmatprep.subr.mxu0 0.0
  %1281 = vmatpush1.msra.mxu0 %v289
  %1282 = vmatprep.subr.mxu0 0.0
  %1283 = vmatpush1.msra.mxu0 0.0
  %1284 = vmatprep.subr.mxu0 0.0
  %1285 = vmatpush1.msra.mxu0 0.0
  %1286 = vmatprep.subr.mxu0 0.0
  %1287 = vmatpush1.msra.mxu0 0.0
  %1288 = vmatprep.subr.mxu0 0.0
  %1289 = vmatpush1.msra.mxu0 0.0
  %1290 = vmatprep.subr.mxu0 0.0
  %1291 = vmatpush1.msra.mxu0 0.0
  %1292 = vmatprep.subr.mxu0 0.0
  %1293 = vmatpush1.msra.mxu0 0.0
  %1294 = vmatprep.subr.mxu0 0.0
  %1295 = vmatpush1.msra.mxu0 0.0
  %1296 = vmatprep.subr.mxu0 0.0
  %1297 = vmatpush1.msra.mxu0 0.0
  %1298 = vmatprep.subr.mxu0 0.0
  %1299 = vmatpush1.msra.mxu0 0.0
  %1300 = vmatprep.subr.mxu0 0.0
  %1301 = vmatpush1.msra.mxu0 0.0
  %1302 = vmatprep.subr.mxu0 0.0
  %1303 = vmatpush1.msra.mxu0 0.0
  %1304 = vmatprep.subr.mxu0 0.0
  %1305 = vmatpush1.msra.mxu0 0.0
  %1306 = vmatprep.subr.mxu0 0.0
  %1307 = vmatpush1.msra.mxu0 0.0
  %1308 = vmatprep.subr.mxu0 0.0
  %1309 = vmatpush1.msra.mxu0 0.0
  %1310 = vmatprep.subr.mxu0 0.0
  %1311 = vmatpush1.msra.mxu0 0.0
  %1312 = vmatprep.subr.mxu0 0.0
  %1313 = vmatpush1.msra.mxu0 0.0
  %1314 = vmatprep.mubr.f32.mxu0 0.0
  %1315 = vmatmul.mubr.f32.gmra.mrb[0].mxu0 %v1172
  %v1316 = vpop.f32.mrb[0].mxu0
  %v1317 = vadd.f32 0.0, %v1316
  %v1318 = vpop.f32.mrb[0].mxu0
  %1319 = vdwg.mxu0
  %1320 = vmatprep.subr.mxu0 0.0
  %1321 = vmatpush1.msra.mxu0 %v258
  %1322 = vmatprep.subr.mxu0 0.0
  %1323 = vmatpush1.msra.mxu0 %v259
  %1324 = vmatprep.subr.mxu0 0.0
  %1325 = vmatpush1.msra.mxu0 %v260
  %1326 = vmatprep.subr.mxu0 0.0
  %1327 = vmatpush1.msra.mxu0 %v261
  %1328 = vmatprep.subr.mxu0 0.0
  %1329 = vmatpush1.msra.mxu0 %v262
  %1330 = vmatprep.subr.mxu0 0.0
  %1331 = vmatpush1.msra.mxu0 %v263
  %1332 = vmatprep.subr.mxu0 0.0
  %1333 = vmatpush1.msra.mxu0 %v264
  %1334 = vmatprep.subr.mxu0 0.0
  %1335 = vmatpush1.msra.mxu0 %v265
  %1336 = vmatprep.subr.mxu0 0.0
  %1337 = vmatpush1.msra.mxu0 %v266
  %1338 = vmatprep.subr.mxu0 0.0
  %1339 = vmatpush1.msra.mxu0 %v267
  %1340 = vmatprep.subr.mxu0 0.0
  %1341 = vmatpush1.msra.mxu0 %v268
  %1342 = vmatprep.subr.mxu0 0.0
  %1343 = vmatpush1.msra.mxu0 %v269
  %1344 = vmatprep.subr.mxu0 0.0
  %1345 = vmatpush1.msra.mxu0 %v270
  %1346 = vmatprep.subr.mxu0 0.0
  %1347 = vmatpush1.msra.mxu0 %v271
  %1348 = vmatprep.subr.mxu0 0.0
  %1349 = vmatpush1.msra.mxu0 %v272
  %1350 = vmatprep.subr.mxu0 0.0
  %1351 = vmatpush1.msra.mxu0 %v273
  %1352 = vmatprep.subr.mxu0 0.0
  %1353 = vmatpush1.msra.mxu0 0.0
  %1354 = vmatprep.subr.mxu0 0.0
  %1355 = vmatpush1.msra.mxu0 0.0
  %1356 = vmatprep.subr.mxu0 0.0
  %1357 = vmatpush1.msra.mxu0 0.0
  %1358 = vmatprep.subr.mxu0 0.0
  %1359 = vmatpush1.msra.mxu0 0.0
  %1360 = vmatprep.subr.mxu0 0.0
  %1361 = vmatpush1.msra.mxu0 0.0
  %1362 = vmatprep.subr.mxu0 0.0
  %1363 = vmatpush1.msra.mxu0 0.0
  %1364 = vmatprep.subr.mxu0 0.0
  %1365 = vmatpush1.msra.mxu0 0.0
  %1366 = vmatprep.subr.mxu0 0.0
  %1367 = vmatpush1.msra.mxu0 0.0
  %1368 = vmatprep.subr.mxu0 0.0
  %1369 = vmatpush1.msra.mxu0 0.0
  %1370 = vmatprep.subr.mxu0 0.0
  %1371 = vmatpush1.msra.mxu0 0.0
  %1372 = vmatprep.subr.mxu0 0.0
  %1373 = vmatpush1.msra.mxu0 0.0
  %1374 = vmatprep.subr.mxu0 0.0
  %1375 = vmatpush1.msra.mxu0 0.0
  %1376 = vmatprep.subr.mxu0 0.0
  %1377 = vmatpush1.msra.mxu0 0.0
  %1378 = vmatprep.subr.mxu0 0.0
  %1379 = vmatpush1.msra.mxu0 0.0
  %1380 = vmatprep.subr.mxu0 0.0
  %1381 = vmatpush1.msra.mxu0 0.0
  %1382 = vmatprep.subr.mxu0 0.0
  %1383 = vmatpush1.msra.mxu0 0.0
  %1384 = vmatprep.mubr.f32.mxu0 0.0
  %1385 = vmatmul.mubr.f32.gmra.mrb[0].mxu0 %v1249
  %v1386 = vpop.f32.mrb[0].mxu0
  %v1387 = vadd.f32 %v1317, %v1386
  %v1388 = vpop.f32.mrb[0].mxu0
  %1389 = vdwg.mxu0
  %v1390 = vadd.f32 %v1387, %v512
  %v1391 = vmax.f32 %v1390, 0.0
  %v1392 = vld [vmem:[#allocation2 + $0x5] sm:$0x1]
  %1393 = vmatprep.subr.mxu0 0.0
  %1394 = vmatpush1.msra.mxu0 %v242
  %1395 = vmatprep.subr.mxu0 0.0
  %1396 = vmatpush1.msra.mxu0 %v243
  %1397 = vmatprep.subr.mxu0 0.0
  %1398 = vmatpush1.msra.mxu0 %v244
  %1399 = vmatprep.subr.mxu0 0.0
  %1400 = vmatpush1.msra.mxu0 %v245
  %1401 = vmatprep.subr.mxu0 0.0
  %1402 = vmatpush1.msra.mxu0 %v246
  %1403 = vmatprep.subr.mxu0 0.0
  %1404 = vmatpush1.msra.mxu0 %v247
  %1405 = vmatprep.subr.mxu0 0.0
  %1406 = vmatpush1.msra.mxu0 %v248
  %1407 = vmatprep.subr.mxu0 0.0
  %1408 = vmatpush1.msra.mxu0 %v249
  %1409 = vmatprep.subr.mxu0 0.0
  %1410 = vmatpush1.msra.mxu0 %v250
  %1411 = vmatprep.subr.mxu0 0.0
  %1412 = vmatpush1.msra.mxu0 %v251
  %1413 = vmatprep.subr.mxu0 0.0
  %1414 = vmatpush1.msra.mxu0 %v252
  %1415 = vmatprep.subr.mxu0 0.0
  %1416 = vmatpush1.msra.mxu0 %v253
  %1417 = vmatprep.subr.mxu0 0.0
  %1418 = vmatpush1.msra.mxu0 %v254
  %1419 = vmatprep.subr.mxu0 0.0
  %1420 = vmatpush1.msra.mxu0 %v255
  %1421 = vmatprep.subr.mxu0 0.0
  %1422 = vmatpush1.msra.mxu0 %v256
  %1423 = vmatprep.subr.mxu0 0.0
  %1424 = vmatpush1.msra.mxu0 %v257
  %1425 = vmatprep.subr.mxu0 0.0
  %1426 = vmatpush1.msra.mxu0 0.0
  %1427 = vmatprep.subr.mxu0 0.0
  %1428 = vmatpush1.msra.mxu0 0.0
  %1429 = vmatprep.subr.mxu0 0.0
  %1430 = vmatpush1.msra.mxu0 0.0
  %1431 = vmatprep.subr.mxu0 0.0
  %1432 = vmatpush1.msra.mxu0 0.0
  %1433 = vmatprep.subr.mxu0 0.0
  %1434 = vmatpush1.msra.mxu0 0.0
  %1435 = vmatprep.subr.mxu0 0.0
  %1436 = vmatpush1.msra.mxu0 0.0
  %1437 = vmatprep.subr.mxu0 0.0
  %1438 = vmatpush1.msra.mxu0 0.0
  %1439 = vmatprep.subr.mxu0 0.0
  %1440 = vmatpush1.msra.mxu0 0.0
  %1441 = vmatprep.subr.mxu0 0.0
  %1442 = vmatpush1.msra.mxu0 0.0
  %1443 = vmatprep.subr.mxu0 0.0
  %1444 = vmatpush1.msra.mxu0 0.0
  %1445 = vmatprep.subr.mxu0 0.0
  %1446 = vmatpush1.msra.mxu0 0.0
  %1447 = vmatprep.subr.mxu0 0.0
  %1448 = vmatpush1.msra.mxu0 0.0
  %1449 = vmatprep.subr.mxu0 0.0
  %1450 = vmatpush1.msra.mxu0 0.0
  %1451 = vmatprep.subr.mxu0 0.0
  %1452 = vmatpush1.msra.mxu0 0.0
  %1453 = vmatprep.subr.mxu0 0.0
  %1454 = vmatpush1.msra.mxu0 0.0
  %1455 = vmatprep.subr.mxu0 0.0
  %1456 = vmatpush1.msra.mxu0 0.0
  %1457 = vmatprep.mubr.f32.mxu0 0.0
  %1458 = vmatmul.mubr.f32.gmra.mrb[0].mxu0 %v1249
  %v1459 = vpop.f32.mrb[0].mxu0
  %v1460 = vadd.f32 0.0, %v1459
  %v1461 = vpop.f32.mrb[0].mxu0
  %1462 = vdwg.mxu0
  %v1463 = vlaneseq
  %v1464 = vshrl.u32 %v1463, 7
  %v1465 = vsub.s32 0, %v1464
  %v1466 = vrot.slane %v1392, %v1465
  %v1467 = vadd.f32 %v1466, %v1460
  %v1468 = vmax.f32 %v1467, 0.0
  %1469 = vmatprep.subr.mxu0 0.0
  %1470 = vmatpush1.msra.mxu0 %v274
  %1471 = vmatprep.subr.mxu0 0.0
  %1472 = vmatpush1.msra.mxu0 %v275
  %1473 = vmatprep.subr.mxu0 0.0
  %1474 = vmatpush1.msra.mxu0 %v276
  %1475 = vmatprep.subr.mxu0 0.0
  %1476 = vmatpush1.msra.mxu0 %v277
  %1477 = vmatprep.subr.mxu0 0.0
  %1478 = vmatpush1.msra.mxu0 %v278
  %1479 = vmatprep.subr.mxu0 0.0
  %1480 = vmatpush1.msra.mxu0 %v279
  %1481 = vmatprep.subr.mxu0 0.0
  %1482 = vmatpush1.msra.mxu0 %v280
  %1483 = vmatprep.subr.mxu0 0.0
  %1484 = vmatpush1.msra.mxu0 %v281
  %1485 = vmatprep.subr.mxu0 0.0
  %1486 = vmatpush1.msra.mxu0 %v282
  %1487 = vmatprep.subr.mxu0 0.0
  %1488 = vmatpush1.msra.mxu0 %v283
  %1489 = vmatprep.subr.mxu0 0.0
  %1490 = vmatpush1.msra.mxu0 %v284
  %1491 = vmatprep.subr.mxu0 0.0
  %1492 = vmatpush1.msra.mxu0 %v285
  %1493 = vmatprep.subr.mxu0 0.0
  %1494 = vmatpush1.msra.mxu0 %v286
  %1495 = vmatprep.subr.mxu0 0.0
  %1496 = vmatpush1.msra.mxu0 %v287
  %1497 = vmatprep.subr.mxu0 0.0
  %1498 = vmatpush1.msra.mxu0 %v288
  %1499 = vmatprep.subr.mxu0 0.0
  %1500 = vmatpush1.msra.mxu0 %v289
  %1501 = vmatprep.subr.mxu0 0.0
  %1502 = vmatpush1.msra.mxu0 0.0
  %1503 = vmatprep.subr.mxu0 0.0
  %1504 = vmatpush1.msra.mxu0 0.0
  %1505 = vmatprep.subr.mxu0 0.0
  %1506 = vmatpush1.msra.mxu0 0.0
  %1507 = vmatprep.subr.mxu0 0.0
  %1508 = vmatpush1.msra.mxu0 0.0
  %1509 = vmatprep.subr.mxu0 0.0
  %1510 = vmatpush1.msra.mxu0 0.0
  %1511 = vmatprep.subr.mxu0 0.0
  %1512 = vmatpush1.msra.mxu0 0.0
  %1513 = vmatprep.subr.mxu0 0.0
  %1514 = vmatpush1.msra.mxu0 0.0
  %1515 = vmatprep.subr.mxu0 0.0
  %1516 = vmatpush1.msra.mxu0 0.0
  %1517 = vmatprep.subr.mxu0 0.0
  %1518 = vmatpush1.msra.mxu0 0.0
  %1519 = vmatprep.subr.mxu0 0.0
  %1520 = vmatpush1.msra.mxu0 0.0
  %1521 = vmatprep.subr.mxu0 0.0
  %1522 = vmatpush1.msra.mxu0 0.0
  %1523 = vmatprep.subr.mxu0 0.0
  %1524 = vmatpush1.msra.mxu0 0.0
  %1525 = vmatprep.subr.mxu0 0.0
  %1526 = vmatpush1.msra.mxu0 0.0
  %1527 = vmatprep.subr.mxu0 0.0
  %1528 = vmatpush1.msra.mxu0 0.0
  %1529 = vmatprep.subr.mxu0 0.0
  %1530 = vmatpush1.msra.mxu0 0.0
  %1531 = vmatprep.subr.mxu0 0.0
  %1532 = vmatpush1.msra.mxu0 0.0
  %1533 = vmatprep.mubr.f32.mxu0 0.0
  %1534 = vmatmul.mubr.f32.gmra.mrb[0].mxu0 %v1391
  %v1535 = vpop.f32.mrb[0].mxu0
  %v1536 = vadd.f32 0.0, %v1535
  %v1537 = vpop.f32.mrb[0].mxu0
  %1538 = vdwg.mxu0
  %1539 = vmatprep.subr.mxu0 0.0
  %1540 = vmatpush1.msra.mxu0 %v258
  %1541 = vmatprep.subr.mxu0 0.0
  %1542 = vmatpush1.msra.mxu0 %v259
  %1543 = vmatprep.subr.mxu0 0.0
  %1544 = vmatpush1.msra.mxu0 %v260
  %1545 = vmatprep.subr.mxu0 0.0
  %1546 = vmatpush1.msra.mxu0 %v261
  %1547 = vmatprep.subr.mxu0 0.0
  %1548 = vmatpush1.msra.mxu0 %v262
  %1549 = vmatprep.subr.mxu0 0.0
  %1550 = vmatpush1.msra.mxu0 %v263
  %1551 = vmatprep.subr.mxu0 0.0
  %1552 = vmatpush1.msra.mxu0 %v264
  %1553 = vmatprep.subr.mxu0 0.0
  %1554 = vmatpush1.msra.mxu0 %v265
  %1555 = vmatprep.subr.mxu0 0.0
  %1556 = vmatpush1.msra.mxu0 %v266
  %1557 = vmatprep.subr.mxu0 0.0
  %1558 = vmatpush1.msra.mxu0 %v267
  %1559 = vmatprep.subr.mxu0 0.0
  %1560 = vmatpush1.msra.mxu0 %v268
  %1561 = vmatprep.subr.mxu0 0.0
  %1562 = vmatpush1.msra.mxu0 %v269
  %1563 = vmatprep.subr.mxu0 0.0
  %1564 = vmatpush1.msra.mxu0 %v270
  %1565 = vmatprep.subr.mxu0 0.0
  %1566 = vmatpush1.msra.mxu0 %v271
  %1567 = vmatprep.subr.mxu0 0.0
  %1568 = vmatpush1.msra.mxu0 %v272
  %1569 = vmatprep.subr.mxu0 0.0
  %1570 = vmatpush1.msra.mxu0 %v273
  %1571 = vmatprep.subr.mxu0 0.0
  %1572 = vmatpush1.msra.mxu0 0.0
  %1573 = vmatprep.subr.mxu0 0.0
  %1574 = vmatpush1.msra.mxu0 0.0
  %1575 = vmatprep.subr.mxu0 0.0
  %1576 = vmatpush1.msra.mxu0 0.0
  %1577 = vmatprep.subr.mxu0 0.0
  %1578 = vmatpush1.msra.mxu0 0.0
  %1579 = vmatprep.subr.mxu0 0.0
  %1580 = vmatpush1.msra.mxu0 0.0
  %1581 = vmatprep.subr.mxu0 0.0
  %1582 = vmatpush1.msra.mxu0 0.0
  %1583 = vmatprep.subr.mxu0 0.0
  %1584 = vmatpush1.msra.mxu0 0.0
  %1585 = vmatprep.subr.mxu0 0.0
  %1586 = vmatpush1.msra.mxu0 0.0
  %1587 = vmatprep.subr.mxu0 0.0
  %1588 = vmatpush1.msra.mxu0 0.0
  %1589 = vmatprep.subr.mxu0 0.0
  %1590 = vmatpush1.msra.mxu0 0.0
  %1591 = vmatprep.subr.mxu0 0.0
  %1592 = vmatpush1.msra.mxu0 0.0
  %1593 = vmatprep.subr.mxu0 0.0
  %1594 = vmatpush1.msra.mxu0 0.0
  %1595 = vmatprep.subr.mxu0 0.0
  %1596 = vmatpush1.msra.mxu0 0.0
  %1597 = vmatprep.subr.mxu0 0.0
  %1598 = vmatpush1.msra.mxu0 0.0
  %1599 = vmatprep.subr.mxu0 0.0
  %1600 = vmatpush1.msra.mxu0 0.0
  %1601 = vmatprep.subr.mxu0 0.0
  %1602 = vmatpush1.msra.mxu0 0.0
  %1603 = vmatprep.mubr.f32.mxu0 0.0
  %1604 = vmatmul.mubr.f32.gmra.mrb[0].mxu0 %v1468
  %v1605 = vpop.f32.mrb[0].mxu0
  %v1606 = vadd.f32 %v1536, %v1605
  %v1607 = vpop.f32.mrb[0].mxu0
  %1608 = vdwg.mxu0
  %v1609 = vadd.f32 %v1606, %v512
  %v1610 = vmax.f32 %v1609, 0.0
  %v1611 = vld [vmem:[#allocation2 + $0x6] sm:$0x1]
  %1612 = vmatprep.subr.mxu0 0.0
  %1613 = vmatpush1.msra.mxu0 %v242
  %1614 = vmatprep.subr.mxu0 0.0
  %1615 = vmatpush1.msra.mxu0 %v243
  %1616 = vmatprep.subr.mxu0 0.0
  %1617 = vmatpush1.msra.mxu0 %v244
  %1618 = vmatprep.subr.mxu0 0.0
  %1619 = vmatpush1.msra.mxu0 %v245
  %1620 = vmatprep.subr.mxu0 0.0
  %1621 = vmatpush1.msra.mxu0 %v246
  %1622 = vmatprep.subr.mxu0 0.0
  %1623 = vmatpush1.msra.mxu0 %v247
  %1624 = vmatprep.subr.mxu0 0.0
  %1625 = vmatpush1.msra.mxu0 %v248
  %1626 = vmatprep.subr.mxu0 0.0
  %1627 = vmatpush1.msra.mxu0 %v249
  %1628 = vmatprep.subr.mxu0 0.0
  %1629 = vmatpush1.msra.mxu0 %v250
  %1630 = vmatprep.subr.mxu0 0.0
  %1631 = vmatpush1.msra.mxu0 %v251
  %1632 = vmatprep.subr.mxu0 0.0
  %1633 = vmatpush1.msra.mxu0 %v252
  %1634 = vmatprep.subr.mxu0 0.0
  %1635 = vmatpush1.msra.mxu0 %v253
  %1636 = vmatprep.subr.mxu0 0.0
  %1637 = vmatpush1.msra.mxu0 %v254
  %1638 = vmatprep.subr.mxu0 0.0
  %1639 = vmatpush1.msra.mxu0 %v255
  %1640 = vmatprep.subr.mxu0 0.0
  %1641 = vmatpush1.msra.mxu0 %v256
  %1642 = vmatprep.subr.mxu0 0.0
  %1643 = vmatpush1.msra.mxu0 %v257
  %1644 = vmatprep.subr.mxu0 0.0
  %1645 = vmatpush1.msra.mxu0 0.0
  %1646 = vmatprep.subr.mxu0 0.0
  %1647 = vmatpush1.msra.mxu0 0.0
  %1648 = vmatprep.subr.mxu0 0.0
  %1649 = vmatpush1.msra.mxu0 0.0
  %1650 = vmatprep.subr.mxu0 0.0
  %1651 = vmatpush1.msra.mxu0 0.0
  %1652 = vmatprep.subr.mxu0 0.0
  %1653 = vmatpush1.msra.mxu0 0.0
  %1654 = vmatprep.subr.mxu0 0.0
  %1655 = vmatpush1.msra.mxu0 0.0
  %1656 = vmatprep.subr.mxu0 0.0
  %1657 = vmatpush1.msra.mxu0 0.0
  %1658 = vmatprep.subr.mxu0 0.0
  %1659 = vmatpush1.msra.mxu0 0.0
  %1660 = vmatprep.subr.mxu0 0.0
  %1661 = vmatpush1.msra.mxu0 0.0
  %1662 = vmatprep.subr.mxu0 0.0
  %1663 = vmatpush1.msra.mxu0 0.0
  %1664 = vmatprep.subr.mxu0 0.0
  %1665 = vmatpush1.msra.mxu0 0.0
  %1666 = vmatprep.subr.mxu0 0.0
  %1667 = vmatpush1.msra.mxu0 0.0
  %1668 = vmatprep.subr.mxu0 0.0
  %1669 = vmatpush1.msra.mxu0 0.0
  %1670 = vmatprep.subr.mxu0 0.0
  %1671 = vmatpush1.msra.mxu0 0.0
  %1672 = vmatprep.subr.mxu0 0.0
  %1673 = vmatpush1.msra.mxu0 0.0
  %1674 = vmatprep.subr.mxu0 0.0
  %1675 = vmatpush1.msra.mxu0 0.0
  %1676 = vmatprep.mubr.f32.mxu0 0.0
  %1677 = vmatmul.mubr.f32.gmra.mrb[0].mxu0 %v1468
  %v1678 = vpop.f32.mrb[0].mxu0
  %v1679 = vadd.f32 0.0, %v1678
  %v1680 = vpop.f32.mrb[0].mxu0
  %1681 = vdwg.mxu0
  %v1682 = vlaneseq
  %v1683 = vshrl.u32 %v1682, 7
  %v1684 = vsub.s32 0, %v1683
  %v1685 = vrot.slane %v1611, %v1684
  %v1686 = vadd.f32 %v1685, %v1679
  %v1687 = vmax.f32 %v1686, 0.0
  %1688 = vmatprep.subr.mxu0 0.0
  %1689 = vmatpush1.msra.mxu0 %v274
  %1690 = vmatprep.subr.mxu0 0.0
  %1691 = vmatpush1.msra.mxu0 %v275
  %1692 = vmatprep.subr.mxu0 0.0
  %1693 = vmatpush1.msra.mxu0 %v276
  %1694 = vmatprep.subr.mxu0 0.0
  %1695 = vmatpush1.msra.mxu0 %v277
  %1696 = vmatprep.subr.mxu0 0.0
  %1697 = vmatpush1.msra.mxu0 %v278
  %1698 = vmatprep.subr.mxu0 0.0
  %1699 = vmatpush1.msra.mxu0 %v279
  %1700 = vmatprep.subr.mxu0 0.0
  %1701 = vmatpush1.msra.mxu0 %v280
  %1702 = vmatprep.subr.mxu0 0.0
  %1703 = vmatpush1.msra.mxu0 %v281
  %1704 = vmatprep.subr.mxu0 0.0
  %1705 = vmatpush1.msra.mxu0 %v282
  %1706 = vmatprep.subr.mxu0 0.0
  %1707 = vmatpush1.msra.mxu0 %v283
  %1708 = vmatprep.subr.mxu0 0.0
  %1709 = vmatpush1.msra.mxu0 %v284
  %1710 = vmatprep.subr.mxu0 0.0
  %1711 = vmatpush1.msra.mxu0 %v285
  %1712 = vmatprep.subr.mxu0 0.0
  %1713 = vmatpush1.msra.mxu0 %v286
  %1714 = vmatprep.subr.mxu0 0.0
  %1715 = vmatpush1.msra.mxu0 %v287
  %1716 = vmatprep.subr.mxu0 0.0
  %1717 = vmatpush1.msra.mxu0 %v288
  %1718 = vmatprep.subr.mxu0 0.0
  %1719 = vmatpush1.msra.mxu0 %v289
  %1720 = vmatprep.subr.mxu0 0.0
  %1721 = vmatpush1.msra.mxu0 0.0
  %1722 = vmatprep.subr.mxu0 0.0
  %1723 = vmatpush1.msra.mxu0 0.0
  %1724 = vmatprep.subr.mxu0 0.0
  %1725 = vmatpush1.msra.mxu0 0.0
  %1726 = vmatprep.subr.mxu0 0.0
  %1727 = vmatpush1.msra.mxu0 0.0
  %1728 = vmatprep.subr.mxu0 0.0
  %1729 = vmatpush1.msra.mxu0 0.0
  %1730 = vmatprep.subr.mxu0 0.0
  %1731 = vmatpush1.msra.mxu0 0.0
  %1732 = vmatprep.subr.mxu0 0.0
  %1733 = vmatpush1.msra.mxu0 0.0
  %1734 = vmatprep.subr.mxu0 0.0
  %1735 = vmatpush1.msra.mxu0 0.0
  %1736 = vmatprep.subr.mxu0 0.0
  %1737 = vmatpush1.msra.mxu0 0.0
  %1738 = vmatprep.subr.mxu0 0.0
  %1739 = vmatpush1.msra.mxu0 0.0
  %1740 = vmatprep.subr.mxu0 0.0
  %1741 = vmatpush1.msra.mxu0 0.0
  %1742 = vmatprep.subr.mxu0 0.0
  %1743 = vmatpush1.msra.mxu0 0.0
  %1744 = vmatprep.subr.mxu0 0.0
  %1745 = vmatpush1.msra.mxu0 0.0
  %1746 = vmatprep.subr.mxu0 0.0
  %1747 = vmatpush1.msra.mxu0 0.0
  %1748 = vmatprep.subr.mxu0 0.0
  %1749 = vmatpush1.msra.mxu0 0.0
  %1750 = vmatprep.subr.mxu0 0.0
  %1751 = vmatpush1.msra.mxu0 0.0
  %1752 = vmatprep.mubr.f32.mxu0 0.0
  %1753 = vmatmul.mubr.f32.gmra.mrb[0].mxu0 %v1610
  %v1754 = vpop.f32.mrb[0].mxu0
  %v1755 = vadd.f32 0.0, %v1754
  %v1756 = vpop.f32.mrb[0].mxu0
  %1757 = vdwg.mxu0
  %1758 = vmatprep.subr.mxu0 0.0
  %1759 = vmatpush1.msra.mxu0 %v258
  %1760 = vmatprep.subr.mxu0 0.0
  %1761 = vmatpush1.msra.mxu0 %v259
  %1762 = vmatprep.subr.mxu0 0.0
  %1763 = vmatpush1.msra.mxu0 %v260
  %1764 = vmatprep.subr.mxu0 0.0
  %1765 = vmatpush1.msra.mxu0 %v261
  %1766 = vmatprep.subr.mxu0 0.0
  %1767 = vmatpush1.msra.mxu0 %v262
  %1768 = vmatprep.subr.mxu0 0.0
  %1769 = vmatpush1.msra.mxu0 %v263
  %1770 = vmatprep.subr.mxu0 0.0
  %1771 = vmatpush1.msra.mxu0 %v264
  %1772 = vmatprep.subr.mxu0 0.0
  %1773 = vmatpush1.msra.mxu0 %v265
  %1774 = vmatprep.subr.mxu0 0.0
  %1775 = vmatpush1.msra.mxu0 %v266
  %1776 = vmatprep.subr.mxu0 0.0
  %1777 = vmatpush1.msra.mxu0 %v267
  %1778 = vmatprep.subr.mxu0 0.0
  %1779 = vmatpush1.msra.mxu0 %v268
  %1780 = vmatprep.subr.mxu0 0.0
  %1781 = vmatpush1.msra.mxu0 %v269
  %1782 = vmatprep.subr.mxu0 0.0
  %1783 = vmatpush1.msra.mxu0 %v270
  %1784 = vmatprep.subr.mxu0 0.0
  %1785 = vmatpush1.msra.mxu0 %v271
  %1786 = vmatprep.subr.mxu0 0.0
  %1787 = vmatpush1.msra.mxu0 %v272
  %1788 = vmatprep.subr.mxu0 0.0
  %1789 = vmatpush1.msra.mxu0 %v273
  %1790 = vmatprep.subr.mxu0 0.0
  %1791 = vmatpush1.msra.mxu0 0.0
  %1792 = vmatprep.subr.mxu0 0.0
  %1793 = vmatpush1.msra.mxu0 0.0
  %1794 = vmatprep.subr.mxu0 0.0
  %1795 = vmatpush1.msra.mxu0 0.0
  %1796 = vmatprep.subr.mxu0 0.0
  %1797 = vmatpush1.msra.mxu0 0.0
  %1798 = vmatprep.subr.mxu0 0.0
  %1799 = vmatpush1.msra.mxu0 0.0
  %1800 = vmatprep.subr.mxu0 0.0
  %1801 = vmatpush1.msra.mxu0 0.0
  %1802 = vmatprep.subr.mxu0 0.0
  %1803 = vmatpush1.msra.mxu0 0.0
  %1804 = vmatprep.subr.mxu0 0.0
  %1805 = vmatpush1.msra.mxu0 0.0
  %1806 = vmatprep.subr.mxu0 0.0
  %1807 = vmatpush1.msra.mxu0 0.0
  %1808 = vmatprep.subr.mxu0 0.0
  %1809 = vmatpush1.msra.mxu0 0.0
  %1810 = vmatprep.subr.mxu0 0.0
  %1811 = vmatpush1.msra.mxu0 0.0
  %1812 = vmatprep.subr.mxu0 0.0
  %1813 = vmatpush1.msra.mxu0 0.0
  %1814 = vmatprep.subr.mxu0 0.0
  %1815 = vmatpush1.msra.mxu0 0.0
  %1816 = vmatprep.subr.mxu0 0.0
  %1817 = vmatpush1.msra.mxu0 0.0
  %1818 = vmatprep.subr.mxu0 0.0
  %1819 = vmatpush1.msra.mxu0 0.0
  %1820 = vmatprep.subr.mxu0 0.0
  %1821 = vmatpush1.msra.mxu0 0.0
  %1822 = vmatprep.mubr.f32.mxu0 0.0
  %1823 = vmatmul.mubr.f32.gmra.mrb[0].mxu0 %v1687
  %v1824 = vpop.f32.mrb[0].mxu0
  %v1825 = vadd.f32 %v1755, %v1824
  %v1826 = vpop.f32.mrb[0].mxu0
  %1827 = vdwg.mxu0
  %v1828 = vadd.f32 %v1825, %v512
  %v1829 = vmax.f32 %v1828, 0.0
  %v1830 = vld [vmem:[#allocation2 + $0x7] sm:$0x1]
  %1831 = vmatprep.subr.mxu0 0.0
  %1832 = vmatpush1.msra.mxu0 %v242
  %1833 = vmatprep.subr.mxu0 0.0
  %1834 = vmatpush1.msra.mxu0 %v243
  %1835 = vmatprep.subr.mxu0 0.0
  %1836 = vmatpush1.msra.mxu0 %v244
  %1837 = vmatprep.subr.mxu0 0.0
  %1838 = vmatpush1.msra.mxu0 %v245
  %1839 = vmatprep.subr.mxu0 0.0
  %1840 = vmatpush1.msra.mxu0 %v246
  %1841 = vmatprep.subr.mxu0 0.0
  %1842 = vmatpush1.msra.mxu0 %v247
  %1843 = vmatprep.subr.mxu0 0.0
  %1844 = vmatpush1.msra.mxu0 %v248
  %1845 = vmatprep.subr.mxu0 0.0
  %1846 = vmatpush1.msra.mxu0 %v249
  %1847 = vmatprep.subr.mxu0 0.0
  %1848 = vmatpush1.msra.mxu0 %v250
  %1849 = vmatprep.subr.mxu0 0.0
  %1850 = vmatpush1.msra.mxu0 %v251
  %1851 = vmatprep.subr.mxu0 0.0
  %1852 = vmatpush1.msra.mxu0 %v252
  %1853 = vmatprep.subr.mxu0 0.0
  %1854 = vmatpush1.msra.mxu0 %v253
  %1855 = vmatprep.subr.mxu0 0.0
  %1856 = vmatpush1.msra.mxu0 %v254
  %1857 = vmatprep.subr.mxu0 0.0
  %1858 = vmatpush1.msra.mxu0 %v255
  %1859 = vmatprep.subr.mxu0 0.0
  %1860 = vmatpush1.msra.mxu0 %v256
  %1861 = vmatprep.subr.mxu0 0.0
  %1862 = vmatpush1.msra.mxu0 %v257
  %1863 = vmatprep.subr.mxu0 0.0
  %1864 = vmatpush1.msra.mxu0 0.0
  %1865 = vmatprep.subr.mxu0 0.0
  %1866 = vmatpush1.msra.mxu0 0.0
  %1867 = vmatprep.subr.mxu0 0.0
  %1868 = vmatpush1.msra.mxu0 0.0
  %1869 = vmatprep.subr.mxu0 0.0
  %1870 = vmatpush1.msra.mxu0 0.0
  %1871 = vmatprep.subr.mxu0 0.0
  %1872 = vmatpush1.msra.mxu0 0.0
  %1873 = vmatprep.subr.mxu0 0.0
  %1874 = vmatpush1.msra.mxu0 0.0
  %1875 = vmatprep.subr.mxu0 0.0
  %1876 = vmatpush1.msra.mxu0 0.0
  %1877 = vmatprep.subr.mxu0 0.0
  %1878 = vmatpush1.msra.mxu0 0.0
  %1879 = vmatprep.subr.mxu0 0.0
  %1880 = vmatpush1.msra.mxu0 0.0
  %1881 = vmatprep.subr.mxu0 0.0
  %1882 = vmatpush1.msra.mxu0 0.0
  %1883 = vmatprep.subr.mxu0 0.0
  %1884 = vmatpush1.msra.mxu0 0.0
  %1885 = vmatprep.subr.mxu0 0.0
  %1886 = vmatpush1.msra.mxu0 0.0
  %1887 = vmatprep.subr.mxu0 0.0
  %1888 = vmatpush1.msra.mxu0 0.0
  %1889 = vmatprep.subr.mxu0 0.0
  %1890 = vmatpush1.msra.mxu0 0.0
  %1891 = vmatprep.subr.mxu0 0.0
  %1892 = vmatpush1.msra.mxu0 0.0
  %1893 = vmatprep.subr.mxu0 0.0
  %1894 = vmatpush1.msra.mxu0 0.0
  %1895 = vmatprep.mubr.f32.mxu0 0.0
  %1896 = vmatmul.mubr.f32.gmra.mrb[0].mxu0 %v1687
  %v1897 = vpop.f32.mrb[0].mxu0
  %v1898 = vadd.f32 0.0, %v1897
  %v1899 = vpop.f32.mrb[0].mxu0
  %1900 = vdwg.mxu0
  %v1901 = vlaneseq
  %v1902 = vshrl.u32 %v1901, 7
  %v1903 = vsub.s32 0, %v1902
  %v1904 = vrot.slane %v1830, %v1903
  %v1905 = vadd.f32 %v1904, %v1898
  %v1906 = vmax.f32 %v1905, 0.0
  %1907 = vmatprep.subr.mxu0 0.0
  %1908 = vmatpush1.msra.mxu0 %v274
  %1909 = vmatprep.subr.mxu0 0.0
  %1910 = vmatpush1.msra.mxu0 %v275
  %1911 = vmatprep.subr.mxu0 0.0
  %1912 = vmatpush1.msra.mxu0 %v276
  %1913 = vmatprep.subr.mxu0 0.0
  %1914 = vmatpush1.msra.mxu0 %v277
  %1915 = vmatprep.subr.mxu0 0.0
  %1916 = vmatpush1.msra.mxu0 %v278
  %1917 = vmatprep.subr.mxu0 0.0
  %1918 = vmatpush1.msra.mxu0 %v279
  %1919 = vmatprep.subr.mxu0 0.0
  %1920 = vmatpush1.msra.mxu0 %v280
  %1921 = vmatprep.subr.mxu0 0.0
  %1922 = vmatpush1.msra.mxu0 %v281
  %1923 = vmatprep.subr.mxu0 0.0
  %1924 = vmatpush1.msra.mxu0 %v282
  %1925 = vmatprep.subr.mxu0 0.0
  %1926 = vmatpush1.msra.mxu0 %v283
  %1927 = vmatprep.subr.mxu0 0.0
  %1928 = vmatpush1.msra.mxu0 %v284
  %1929 = vmatprep.subr.mxu0 0.0
  %1930 = vmatpush1.msra.mxu0 %v285
  %1931 = vmatprep.subr.mxu0 0.0
  %1932 = vmatpush1.msra.mxu0 %v286
  %1933 = vmatprep.subr.mxu0 0.0
  %1934 = vmatpush1.msra.mxu0 %v287
  %1935 = vmatprep.subr.mxu0 0.0
  %1936 = vmatpush1.msra.mxu0 %v288
  %1937 = vmatprep.subr.mxu0 0.0
  %1938 = vmatpush1.msra.mxu0 %v289
  %1939 = vmatprep.subr.mxu0 0.0
  %1940 = vmatpush1.msra.mxu0 0.0
  %1941 = vmatprep.subr.mxu0 0.0
  %1942 = vmatpush1.msra.mxu0 0.0
  %1943 = vmatprep.subr.mxu0 0.0
  %1944 = vmatpush1.msra.mxu0 0.0
  %1945 = vmatprep.subr.mxu0 0.0
  %1946 = vmatpush1.msra.mxu0 0.0
  %1947 = vmatprep.subr.mxu0 0.0
  %1948 = vmatpush1.msra.mxu0 0.0
  %1949 = vmatprep.subr.mxu0 0.0
  %1950 = vmatpush1.msra.mxu0 0.0
  %1951 = vmatprep.subr.mxu0 0.0
  %1952 = vmatpush1.msra.mxu0 0.0
  %1953 = vmatprep.subr.mxu0 0.0
  %1954 = vmatpush1.msra.mxu0 0.0
  %1955 = vmatprep.subr.mxu0 0.0
  %1956 = vmatpush1.msra.mxu0 0.0
  %1957 = vmatprep.subr.mxu0 0.0
  %1958 = vmatpush1.msra.mxu0 0.0
  %1959 = vmatprep.subr.mxu0 0.0
  %1960 = vmatpush1.msra.mxu0 0.0
  %1961 = vmatprep.subr.mxu0 0.0
  %1962 = vmatpush1.msra.mxu0 0.0
  %1963 = vmatprep.subr.mxu0 0.0
  %1964 = vmatpush1.msra.mxu0 0.0
  %1965 = vmatprep.subr.mxu0 0.0
  %1966 = vmatpush1.msra.mxu0 0.0
  %1967 = vmatprep.subr.mxu0 0.0
  %1968 = vmatpush1.msra.mxu0 0.0
  %1969 = vmatprep.subr.mxu0 0.0
  %1970 = vmatpush1.msra.mxu0 0.0
  %1971 = vmatprep.mubr.f32.mxu0 0.0
  %1972 = vmatmul.mubr.f32.gmra.mrb[0].mxu0 %v1829
  %v1973 = vpop.f32.mrb[0].mxu0
  %v1974 = vadd.f32 0.0, %v1973
  %v1975 = vpop.f32.mrb[0].mxu0
  %1976 = vdwg.mxu0
  %1977 = vmatprep.subr.mxu0 0.0
  %1978 = vmatpush1.msra.mxu0 %v258
  %1979 = vmatprep.subr.mxu0 0.0
  %1980 = vmatpush1.msra.mxu0 %v259
  %1981 = vmatprep.subr.mxu0 0.0
  %1982 = vmatpush1.msra.mxu0 %v260
  %1983 = vmatprep.subr.mxu0 0.0
  %1984 = vmatpush1.msra.mxu0 %v261
  %1985 = vmatprep.subr.mxu0 0.0
  %1986 = vmatpush1.msra.mxu0 %v262
  %1987 = vmatprep.subr.mxu0 0.0
  %1988 = vmatpush1.msra.mxu0 %v263
  %1989 = vmatprep.subr.mxu0 0.0
  %1990 = vmatpush1.msra.mxu0 %v264
  %1991 = vmatprep.subr.mxu0 0.0
  %1992 = vmatpush1.msra.mxu0 %v265
  %1993 = vmatprep.subr.mxu0 0.0
  %1994 = vmatpush1.msra.mxu0 %v266
  %1995 = vmatprep.subr.mxu0 0.0
  %1996 = vmatpush1.msra.mxu0 %v267
  %1997 = vmatprep.subr.mxu0 0.0
  %1998 = vmatpush1.msra.mxu0 %v268
  %1999 = vmatprep.subr.mxu0 0.0
  %2000 = vmatpush1.msra.mxu0 %v269
  %2001 = vmatprep.subr.mxu0 0.0
  %2002 = vmatpush1.msra.mxu0 %v270
  %2003 = vmatprep.subr.mxu0 0.0
  %2004 = vmatpush1.msra.mxu0 %v271
  %2005 = vmatprep.subr.mxu0 0.0
  %2006 = vmatpush1.msra.mxu0 %v272
  %2007 = vmatprep.subr.mxu0 0.0
  %2008 = vmatpush1.msra.mxu0 %v273
  %2009 = vmatprep.subr.mxu0 0.0
  %2010 = vmatpush1.msra.mxu0 0.0
  %2011 = vmatprep.subr.mxu0 0.0
  %2012 = vmatpush1.msra.mxu0 0.0
  %2013 = vmatprep.subr.mxu0 0.0
  %2014 = vmatpush1.msra.mxu0 0.0
  %2015 = vmatprep.subr.mxu0 0.0
  %2016 = vmatpush1.msra.mxu0 0.0
  %2017 = vmatprep.subr.mxu0 0.0
  %2018 = vmatpush1.msra.mxu0 0.0
  %2019 = vmatprep.subr.mxu0 0.0
  %2020 = vmatpush1.msra.mxu0 0.0
  %2021 = vmatprep.subr.mxu0 0.0
  %2022 = vmatpush1.msra.mxu0 0.0
  %2023 = vmatprep.subr.mxu0 0.0
  %2024 = vmatpush1.msra.mxu0 0.0
  %2025 = vmatprep.subr.mxu0 0.0
  %2026 = vmatpush1.msra.mxu0 0.0
  %2027 = vmatprep.subr.mxu0 0.0
  %2028 = vmatpush1.msra.mxu0 0.0
  %2029 = vmatprep.subr.mxu0 0.0
  %2030 = vmatpush1.msra.mxu0 0.0
  %2031 = vmatprep.subr.mxu0 0.0
  %2032 = vmatpush1.msra.mxu0 0.0
  %2033 = vmatprep.subr.mxu0 0.0
  %2034 = vmatpush1.msra.mxu0 0.0
  %2035 = vmatprep.subr.mxu0 0.0
  %2036 = vmatpush1.msra.mxu0 0.0
  %2037 = vmatprep.subr.mxu0 0.0
  %2038 = vmatpush1.msra.mxu0 0.0
  %2039 = vmatprep.subr.mxu0 0.0
  %2040 = vmatpush1.msra.mxu0 0.0
  %2041 = vmatprep.mubr.f32.mxu0 0.0
  %2042 = vmatmul.mubr.f32.gmra.mrb[0].mxu0 %v1906
  %v2043 = vpop.f32.mrb[0].mxu0
  %v2044 = vadd.f32 %v1974, %v2043
  %v2045 = vpop.f32.mrb[0].mxu0
  %2046 = vdwg.mxu0
  %v2047 = vadd.f32 %v2044, %v512
  %v2048 = vmax.f32 %v2047, 0.0
  %2049 = vst [vmem:[%s7] sm:$0xff] %v1906
  %s2050 = scalar_lea.vmem %s7, 8
  %2051 = vst [vmem:[%s2050] sm:$0xff] %v2048
  // Predicated region
  $region30: #{rnn_forward.1} parent=0 // pred_check
    _
  $region31: #{rnn_forward.1} parent=0 // pred_check_branch
    %2053 = sbr.rel (0) target = $region33
  $region32: #{rnn_forward.1} parent=0 // pred_region
    _
  $region33: #{rnn_forward.1} parent=0 // pred_fallthru
    _
  // Predicated region
  $region34: #{rnn_forward.1} parent=0 // pred_check
    _
  $region35: #{rnn_forward.1} parent=0 // pred_check_branch
    %2055 = sbr.rel (0) target = $region37
  $region36: #{rnn_forward.1} parent=0 // pred_region
    _
  $region37: #{rnn_forward.1} parent=0 // pred_fallthru
    _

</llo_original>
